<compile_context>
chip_gen: v6e
topology: v6e:2x2x1
jax: 0.10.0
libtpu: 0.0.40
codegen_flags: <defaults>
</compile_context>

<pallas_src>
import functools

import jax
import jax.numpy as jnp
from jax.experimental import pallas as pl
from jax.experimental.pallas import tpu as pltpu


# ----------------------------- in-kernel helpers ------------------------------

def _im2col_3x3(a, masks, Ww):
    """im2col for a 3x3 / pad=1 / stride=1 conv in (channels, batch*H*W) layout.

    a:     (C, L) activations; lanes ordered (batch-major, row-major HxW).
    masks: (9, L) 0/1 tap-validity masks (precomputed in the wrapper).
    Returns (9*C, L): row (k*C + c) holds tap k = di*3 + dj of channel c.
    """
    C, L = a.shape
    G = Ww + 1                                     # max |tap lane offset|
    z = jnp.zeros((C, G), dtype=a.dtype)
    apad = jnp.concatenate([z, a, z], axis=1)      # value-level zero pad
    taps = []
    for k in range(9):
        di, dj = divmod(k, 3)
        off = (di - 1) * Ww + (dj - 1)             # lane shift of this tap
        shifted = apad[:, G + off:G + off + L]     # static lane slice
        taps.append(shifted * masks[k:k + 1, :])   # mask out-of-image taps
    return jnp.concatenate(taps, axis=0)           # (9*C, L)


# ------------------------------- fused kernel ---------------------------------

def _preact_block_kernel(x_ref, s1_ref, b1_ref, s2_ref, b2_ref,
                         w1_ref, w2_ref, m1_ref, m2_ref, *rest,
                         W, Wo, stride, has_proj, mxu_dtype):
    o_ref = rest[-1]
    i = 0
    sel_ref = None
    if stride != 1:
        sel_ref = rest[i]
        i += 1
    wsc_ref = rest[i] if has_proj else None

    f32 = jnp.float32
    prec = (jax.lax.Precision.HIGHEST if mxu_dtype == jnp.dtype(jnp.float32)
            else jax.lax.Precision.DEFAULT)

    # ---- BN1 (folded running stats) + ReLU; lane-dense over Bn*H*W ----------
    x = x_ref[...].astype(f32)                               # (Cin, L1)
    a = jnp.maximum(x * s1_ref[...] + b1_ref[...], 0.0)      # (Cin, L1)

    # ---- conv1: value-based im2col + ONE MXU matmul (depth 9*Cin) -----------
    t1 = _im2col_3x3(a, m1_ref[...], W).astype(mxu_dtype)    # (9*Cin, L1)
    conv1 = jnp.dot(w1_ref[...], t1,
                    preferred_element_type=f32, precision=prec)   # (Cout, L1)

    # ---- stride handling: hoisted, grid-invariant 0/1 selection matmul ------
    if stride != 1:
        sel = sel_ref[...]                                   # (L1, L2)
        out1 = jnp.dot(conv1.astype(mxu_dtype), sel,
                       preferred_element_type=f32, precision=prec)
        a_sc = jnp.dot(a.astype(mxu_dtype), sel,
                       preferred_element_type=f32, precision=prec)
    else:
        out1 = conv1                                         # (Cout, L2)
        a_sc = a

    # ---- shortcut: weight-normed 1x1 projection or identity ------------------
    if has_proj:
        shortcut = jnp.dot(wsc_ref[...], a_sc.astype(mxu_dtype),
                           preferred_element_type=f32, precision=prec)
    else:
        shortcut = a_sc                    # identity: Cin == Cout, stride == 1

    # TODO(synk): nn.Dropout2d is the identity in eval mode; train-mode channel
    # dropout and batch-statistics BatchNorm are not implemented.

    # ---- BN2 + ReLU ----------------------------------------------------------
    c = jnp.maximum(out1 * s2_ref[...] + b2_ref[...], 0.0)   # (Cout, L2)

    # ---- conv2 (stride 1, pad 1) + fused residual add ------------------------
    t2 = _im2col_3x3(c, m2_ref[...], Wo).astype(mxu_dtype)   # (9*Cout, L2)
    out2 = jnp.dot(w2_ref[...], t2,
                   preferred_element_type=f32, precision=prec) + shortcut

    # Lane-dense, unmasked store: (Cout, Bn*Ho*Wo), already channels-first.
    o_ref[...] = out2.astype(o_ref.dtype)


# ---------------------------------- wrapper -----------------------------------

def _fold_bn(gamma, beta, mean, var, eps=1e-5):
    scale = gamma / jnp.sqrt(var + eps)
    return scale, beta - mean * scale


def _weight_norm(v, g):
    # PyTorch weight_norm(dim=0): w = g * v / ||v||_2 over dims (1, 2, 3).
    norm = jnp.sqrt(jnp.sum(v * v, axis=(1, 2, 3), keepdims=True))
    return g.reshape(-1, 1, 1, 1) * v / norm


def _tap_masks(Bn, Hh, Ww):
    # masks[k, b*H*W + y*W + x] = 1 iff tap k=(di,dj) of a 3x3/pad-1 conv at
    # output pixel (y, x) reads an in-bounds input pixel.  Grid-invariant.
    P = Hh * Ww
    l = jnp.arange(Bn * P, dtype=jnp.int32)
    y = (l % P) // Ww
    x = l % Ww
    rows = []
    for k in range(9):
        di, dj = divmod(k, 3)
        r, c = y + di - 1, x + dj - 1
        rows.append((r >= 0) & (r < Hh) & (c >= 0) & (c < Ww))
    return jnp.stack(rows).astype(jnp.float32)               # (9, Bn*H*W)


def preact_block_wndrop_forward(x_nchw, params, *, in_planes, planes, stride,
                                batch_per_step=None, mxu_dtype=jnp.bfloat16):
    """Fused Pallas forward of PreActBlock_WNdrop (eval mode)."""
    mxu_dtype = jnp.dtype(mxu_dtype)
    N, C, H, W = x_nchw.shape
    assert C == in_planes
    Cin, Cout = in_planes, planes
    Ho = (H + 2 - 3) // stride + 1
    Wo = (W + 2 - 3) // stride + 1
    has_proj = (stride != 1) or (in_planes != planes)
    if not has_proj:
        assert Cin == Cout, "identity shortcut requires in_planes == planes"

    # Images folded into the lane axis per grid step (overhead amortization;
    # keep >=2 grid steps when possible so v7x megacore has parallel work).
    if batch_per_step is None:
        Bn = min(N, 4)
        while N % Bn:
            Bn -= 1
    else:
        Bn = batch_per_step
    assert N % Bn == 0
    P1, P2 = H * W, Ho * Wo
    L1, L2 = Bn * P1, Bn * P2
    assert (L1 % 128 == 0 or Bn == N) and (L2 % 128 == 0 or Bn == N), (
        "fold enough images per step for 128-lane-aligned blocks")

    # Channels-on-sublane / (batch, spatial)-on-lane layout:
    #   X[c, n*H*W + y*W + x]; one grid step sees Bn whole images.
    xr = jnp.transpose(x_nchw, (1, 0, 2, 3)).reshape(Cin, N * P1)
    xr = xr.astype(jnp.float32)

    s1, b1 = _fold_bn(params["bn1_gamma"], params["bn1_beta"],
                      params["bn1_mean"], params["bn1_var"])
    s2, b2 = _fold_bn(params["bn2_gamma"], params["bn2_beta"],
                      params["bn2_mean"], params["bn2_var"])
    s1 = s1.reshape(Cin, 1).astype(jnp.float32)
    b1 = b1.reshape(Cin, 1).astype(jnp.float32)
    s2 = s2.reshape(Cout, 1).astype(jnp.float32)
    b2 = b2.reshape(Cout, 1).astype(jnp.float32)

    # Weights in "weights @ taps" form (Cout, 9*C); column = (di*3+dj)*C + ci.
    w1m = jnp.transpose(params["w1"], (0, 2, 3, 1)).reshape(Cout, 9 * Cin)
    w2m = jnp.transpose(params["w2"], (0, 2, 3, 1)).reshape(Cout, 9 * Cout)
    w1m = w1m.astype(mxu_dtype)
    w2m = w2m.astype(mxu_dtype)

    # Grid-invariant tap-validity masks (hoisted out of the kernel body).
    m1 = _tap_masks(Bn, H, W)        # (9, L1)
    m2 = _tap_masks(Bn, Ho, Wo)      # (9, L2)

    def cspec(shape):                # grid-invariant block: DMA'd once
        return pl.BlockSpec(shape, lambda n: (0, 0))

    inputs = [xr, s1, b1, s2, b2, w1m, w2m, m1, m2]
    in_specs = [
        pl.BlockSpec((Cin, L1), lambda n: (0, n)),          # x (Bn images)
        cspec((Cin, 1)), cspec((Cin, 1)),                   # bn1 scale/bias
        cspec((Cout, 1)), cspec((Cout, 1)),                 # bn2 scale/bias
        cspec((Cout, 9 * Cin)), cspec((Cout, 9 * Cout)),    # w1, w2
        cspec((9, L1)), cspec((9, L2)),                     # tap masks
    ]
    if stride != 1:
        # Hoisted 0/1 selection of strided output positions, block-diagonal
        # over the Bn images of one step; exact in any matmul dtype.
        q = jnp.arange(L2)
        src = ((q // P2) * P1
               + ((q % P2) // Wo) * (stride * W)
               + (q % Wo) * stride)
        sel = (jnp.arange(L1)[:, None] == src[None, :]).astype(mxu_dtype)
        inputs.append(sel)
        in_specs.append(cspec((L1, L2)))
    if has_proj:
        wsc = params["w_sc"].reshape(Cout, Cin).astype(mxu_dtype)
        inputs.append(wsc)
        in_specs.append(cspec((Cout, Cin)))

    kernel = functools.partial(
        _preact_block_kernel, W=W, Wo=Wo, stride=stride,
        has_proj=has_proj, mxu_dtype=mxu_dtype)

    out = pl.pallas_call(
        kernel,
        out_shape=jax.ShapeDtypeStruct((Cout, N * P2), jnp.float32),
        grid=(N // Bn,),
        in_specs=in_specs,
        out_specs=pl.BlockSpec((Cout, L2), lambda n: (0, n)),
        compiler_params=pltpu.CompilerParams(
            dimension_semantics=("parallel",)),
    )(*inputs)

    # (Cout, N*Ho*Wo) -> (N, Cout, Ho, Wo): cheap leading-axes swap only.
    return jnp.transpose(out.reshape(Cout, N, Ho, Wo), (1, 0, 2, 3))


# -------------------------- pure-JAX reference (check) -------------------------

def _reference_forward(x, params, *, in_planes, planes, stride):
    eps = 1e-5

    def bn(z, g, b, m, v):
        g, b, m, v = (t[None, :, None, None] for t in (g, b, m, v))
        return (z - m) / jnp.sqrt(v + eps) * g + b

    def conv(z, w, s, p):
        return jax.lax.conv_general_dilated(
            z, w, (s, s), [(p, p), (p, p)],
            dimension_numbers=("NCHW", "OIHW", "NCHW"),
            precision=jax.lax.Precision.HIGHEST)

    a = jax.nn.relu(bn(x, params["bn1_gamma"], params["bn1_beta"],
                       params["bn1_mean"], params["bn1_var"]))
    if stride != 1 or in_planes != planes:
        sc = conv(a, params["w_sc"], stride, 0)
    else:
        sc = a
    out = conv(a, params["w1"], stride, 1)
    c = jax.nn.relu(bn(out, params["bn2_gamma"], params["bn2_beta"],
                       params["bn2_mean"], params["bn2_var"]))
    return conv(c, params["w2"], 1, 1) + sc


# ------------------------------------ main -------------------------------------

def _make_params(key, in_planes, planes, has_proj):
    ks = jax.random.split(key, 16)
    params = {
        "bn1_gamma": jax.random.uniform(ks[0], (in_planes,), minval=0.5, maxval=1.5),
        "bn1_beta": 0.1 * jax.random.normal(ks[1], (in_planes,), jnp.float32),
        "bn1_mean": 0.1 * jax.random.normal(ks[2], (in_planes,), jnp.float32),
        "bn1_var": jax.random.uniform(ks[3], (in_planes,), minval=0.5, maxval=1.5),
        "bn2_gamma": jax.random.uniform(ks[4], (planes,), minval=0.5, maxval=1.5),
        "bn2_beta": 0.1 * jax.random.normal(ks[5], (planes,), jnp.float32),
        "bn2_mean": 0.1 * jax.random.normal(ks[6], (planes,), jnp.float32),
        "bn2_var": jax.random.uniform(ks[7], (planes,), minval=0.5, maxval=1.5),
    }
    conv1_v = jax.random.normal(ks[8], (planes, in_planes, 3, 3), jnp.float32)
    conv1_g = jax.random.uniform(ks[9], (planes,), minval=0.5, maxval=1.5)
    conv2_v = jax.random.normal(ks[10], (planes, planes, 3, 3), jnp.float32)
    conv2_g = jax.random.uniform(ks[11], (planes,), minval=0.5, maxval=1.5)
    params["w1"] = _weight_norm(conv1_v, conv1_g)
    params["w2"] = _weight_norm(conv2_v, conv2_g)
    if has_proj:
        sc_v = jax.random.normal(ks[12], (planes, in_planes, 1, 1), jnp.float32)
        sc_g = jax.random.uniform(ks[13], (planes,), minval=0.5, maxval=1.5)
        params["w_sc"] = _weight_norm(sc_v, sc_g)
    return params, ks[14]


def _check(out, ref, atol, rtol):
    assert out.shape == ref.shape, (out.shape, ref.shape)
    ok = bool(jnp.allclose(out, ref, atol=atol, rtol=rtol))
    assert ok, float(jnp.max(jnp.abs(out - ref)))


if __name__ == "__main__":
    dropout_rate = 0.3    # unused: eval-mode Dropout2d is the identity

    # ---- Config A: stride-2 block with projection shortcut, 2 images/step ----
    N, in_planes, planes, H, W, stride = 4, 4, 8, 16, 16, 2
    params_a, kx = _make_params(jax.random.PRNGKey(0), in_planes, planes, True)
    x_a = jax.random.normal(kx, (N, in_planes, H, W), jnp.float32)
    ref_a = _reference_forward(x_a, params_a, in_planes=in_planes,
                               planes=planes, stride=stride)

    # bf16 MXU inputs / f32 accumulation (native v6e/v7x path; bf16 tolerance).
    out_a = preact_block_wndrop_forward(
        x_a, params_a, in_planes=in_planes, planes=planes, stride=stride,
        batch_per_step=2, mxu_dtype=jnp.bfloat16)
    _check(jax.block_until_ready(out_a), ref_a, atol=1e-1, rtol=5e-2)

    # f32 / HIGHEST path: tight gate proving im2col / stride / BN-fold math.
    out_a32 = preact_block_wndrop_forward(
        x_a, params_a, in_planes=in_planes, planes=planes, stride=stride,
        batch_per_step=2, mxu_dtype=jnp.float32)
    _check(jax.block_until_ready(out_a32), ref_a, atol=1e-3, rtol=1e-3)

    # ---- Config B: stride-1 block with identity shortcut ---------------------
    N, in_planes, planes, H, W, stride = 2, 8, 8, 16, 16, 1
    params_b, kx2 = _make_params(jax.random.PRNGKey(1), in_planes, planes, False)
    x_b = jax.random.normal(kx2, (N, in_planes, H, W), jnp.float32)
    ref_b = _reference_forward(x_b, params_b, in_planes=in_planes,
                               planes=planes, stride=stride)

    out_b = preact_block_wndrop_forward(
        x_b, params_b, in_planes=in_planes, planes=planes, stride=stride,
        batch_per_step=2, mxu_dtype=jnp.bfloat16)
    _check(jax.block_until_ready(out_b), ref_b, atol=1e-1, rtol=5e-2)

    out_b32 = preact_block_wndrop_forward(
        x_b, params_b, in_planes=in_planes, planes=planes, stride=stride,
        batch_per_step=2, mxu_dtype=jnp.float32)
    _check(jax.block_until_ready(out_b32), ref_b, atol=1e-3, rtol=1e-3)

    print("KERNEL_OK")
</pallas_src>

<mosaic_0001>
module attributes {stable_mosaic.version = 11 : i64} {
  func.func @_preact_block_kernel(%arg0: i32, %arg1: memref<4x512xf32, #tpu.memory_space<vmem>>, %arg2: memref<4x1xf32, #tpu.memory_space<vmem>>, %arg3: memref<4x1xf32, #tpu.memory_space<vmem>>, %arg4: memref<8x1xf32, #tpu.memory_space<vmem>>, %arg5: memref<8x1xf32, #tpu.memory_space<vmem>>, %arg6: memref<8x36xbf16, #tpu.memory_space<vmem>>, %arg7: memref<8x72xbf16, #tpu.memory_space<vmem>>, %arg8: memref<9x512xf32, #tpu.memory_space<vmem>>, %arg9: memref<9x128xf32, #tpu.memory_space<vmem>>, %arg10: memref<512x128xbf16, #tpu.memory_space<vmem>>, %arg11: memref<8x4xbf16, #tpu.memory_space<vmem>>, %arg12: memref<8x128xf32, #tpu.memory_space<vmem>>) attributes {dimension_semantics = [#tpu.dimension_semantics<parallel>], iteration_bounds = array<i64: 2>, scalar_prefetch = 0 : i64, scratch_operands = 0 : i64, tpu.core_type = #tpu.core_type<tc>, window_params = [{transform_indices = @transform_0, window_bounds = array<i64: 4, 512>}, {pipeline_mode = #tpu.pipeline_mode<synchronous>, transform_indices = @transform_1, window_bounds = array<i64: 4, 1>}, {pipeline_mode = #tpu.pipeline_mode<synchronous>, transform_indices = @transform_2, window_bounds = array<i64: 4, 1>}, {pipeline_mode = #tpu.pipeline_mode<synchronous>, transform_indices = @transform_3, window_bounds = array<i64: 8, 1>}, {pipeline_mode = #tpu.pipeline_mode<synchronous>, transform_indices = @transform_4, window_bounds = array<i64: 8, 1>}, {pipeline_mode = #tpu.pipeline_mode<synchronous>, transform_indices = @transform_5, window_bounds = array<i64: 8, 36>}, {pipeline_mode = #tpu.pipeline_mode<synchronous>, transform_indices = @transform_6, window_bounds = array<i64: 8, 72>}, {pipeline_mode = #tpu.pipeline_mode<synchronous>, transform_indices = @transform_7, window_bounds = array<i64: 9, 512>}, {pipeline_mode = #tpu.pipeline_mode<synchronous>, transform_indices = @transform_8, window_bounds = array<i64: 9, 128>}, {pipeline_mode = #tpu.pipeline_mode<synchronous>, transform_indices = @transform_9, window_bounds = array<i64: 512, 128>}, {pipeline_mode = #tpu.pipeline_mode<synchronous>, transform_indices = @transform_10, window_bounds = array<i64: 8, 4>}, {transform_indices = @transform_11, window_bounds = array<i64: 8, 128>}]} {
    %c0 = arith.constant 0 : index
    %c0_0 = arith.constant 0 : index
    %0 = vector.load %arg1[%c0, %c0_0] : memref<4x512xf32, #tpu.memory_space<vmem>>, vector<4x512xf32>
    %c0_1 = arith.constant 0 : index
    %c0_2 = arith.constant 0 : index
    %1 = vector.load %arg2[%c0_1, %c0_2] : memref<4x1xf32, #tpu.memory_space<vmem>>, vector<4x1xf32>
    %2 = vector.broadcast %1 : vector<4x1xf32> to vector<4x512xf32>
    %3 = arith.mulf %0, %2 : vector<4x512xf32>
    %c0_3 = arith.constant 0 : index
    %c0_4 = arith.constant 0 : index
    %4 = vector.load %arg3[%c0_3, %c0_4] : memref<4x1xf32, #tpu.memory_space<vmem>>, vector<4x1xf32>
    %5 = vector.broadcast %4 : vector<4x1xf32> to vector<4x512xf32>
    %6 = arith.addf %3, %5 : vector<4x512xf32>
    %cst = arith.constant 0.000000e+00 : f32
    %7 = vector.broadcast %cst : f32 to vector<4x512xf32>
    %8 = arith.maximumf %6, %7 : vector<4x512xf32>
    %c0_5 = arith.constant 0 : index
    %c0_6 = arith.constant 0 : index
    %9 = vector.load %arg8[%c0_5, %c0_6] : memref<9x512xf32, #tpu.memory_space<vmem>>, vector<9x512xf32>
    %cst_7 = arith.constant 0.000000e+00 : f32
    %10 = vector.broadcast %cst_7 : f32 to vector<4x17xf32>
    %11 = tpu.concatenate %10, %8, %10 in 1 : vector<4x17xf32>, vector<4x512xf32>, vector<4x17xf32> -> vector<4x546xf32>
    %12 = vector.extract_strided_slice %11 {offsets = [0, 0], sizes = [4, 512], strides = [1, 1]} : vector<4x546xf32> to vector<4x512xf32>
    %13 = vector.extract_strided_slice %9 {offsets = [0, 0], sizes = [1, 512], strides = [1, 1]} : vector<9x512xf32> to vector<1x512xf32>
    %14 = vector.broadcast %13 : vector<1x512xf32> to vector<4x512xf32>
    %15 = arith.mulf %12, %14 : vector<4x512xf32>
    %16 = vector.extract_strided_slice %11 {offsets = [0, 1], sizes = [4, 512], strides = [1, 1]} : vector<4x546xf32> to vector<4x512xf32>
    %17 = vector.extract_strided_slice %9 {offsets = [1, 0], sizes = [1, 512], strides = [1, 1]} : vector<9x512xf32> to vector<1x512xf32>
    %18 = vector.broadcast %17 : vector<1x512xf32> to vector<4x512xf32>
    %19 = arith.mulf %16, %18 : vector<4x512xf32>
    %20 = vector.extract_strided_slice %11 {offsets = [0, 2], sizes = [4, 512], strides = [1, 1]} : vector<4x546xf32> to vector<4x512xf32>
    %21 = vector.extract_strided_slice %9 {offsets = [2, 0], sizes = [1, 512], strides = [1, 1]} : vector<9x512xf32> to vector<1x512xf32>
    %22 = vector.broadcast %21 : vector<1x512xf32> to vector<4x512xf32>
    %23 = arith.mulf %20, %22 : vector<4x512xf32>
    %24 = vector.extract_strided_slice %11 {offsets = [0, 16], sizes = [4, 512], strides = [1, 1]} : vector<4x546xf32> to vector<4x512xf32>
    %25 = vector.extract_strided_slice %9 {offsets = [3, 0], sizes = [1, 512], strides = [1, 1]} : vector<9x512xf32> to vector<1x512xf32>
    %26 = vector.broadcast %25 : vector<1x512xf32> to vector<4x512xf32>
    %27 = arith.mulf %24, %26 : vector<4x512xf32>
    %28 = vector.extract_strided_slice %11 {offsets = [0, 17], sizes = [4, 512], strides = [1, 1]} : vector<4x546xf32> to vector<4x512xf32>
    %29 = vector.extract_strided_slice %9 {offsets = [4, 0], sizes = [1, 512], strides = [1, 1]} : vector<9x512xf32> to vector<1x512xf32>
    %30 = vector.broadcast %29 : vector<1x512xf32> to vector<4x512xf32>
    %31 = arith.mulf %28, %30 : vector<4x512xf32>
    %32 = vector.extract_strided_slice %11 {offsets = [0, 18], sizes = [4, 512], strides = [1, 1]} : vector<4x546xf32> to vector<4x512xf32>
    %33 = vector.extract_strided_slice %9 {offsets = [5, 0], sizes = [1, 512], strides = [1, 1]} : vector<9x512xf32> to vector<1x512xf32>
    %34 = vector.broadcast %33 : vector<1x512xf32> to vector<4x512xf32>
    %35 = arith.mulf %32, %34 : vector<4x512xf32>
    %36 = vector.extract_strided_slice %11 {offsets = [0, 32], sizes = [4, 512], strides = [1, 1]} : vector<4x546xf32> to vector<4x512xf32>
    %37 = vector.extract_strided_slice %9 {offsets = [6, 0], sizes = [1, 512], strides = [1, 1]} : vector<9x512xf32> to vector<1x512xf32>
    %38 = vector.broadcast %37 : vector<1x512xf32> to vector<4x512xf32>
    %39 = arith.mulf %36, %38 : vector<4x512xf32>
    %40 = vector.extract_strided_slice %11 {offsets = [0, 33], sizes = [4, 512], strides = [1, 1]} : vector<4x546xf32> to vector<4x512xf32>
    %41 = vector.extract_strided_slice %9 {offsets = [7, 0], sizes = [1, 512], strides = [1, 1]} : vector<9x512xf32> to vector<1x512xf32>
    %42 = vector.broadcast %41 : vector<1x512xf32> to vector<4x512xf32>
    %43 = arith.mulf %40, %42 : vector<4x512xf32>
    %44 = vector.extract_strided_slice %11 {offsets = [0, 34], sizes = [4, 512], strides = [1, 1]} : vector<4x546xf32> to vector<4x512xf32>
    %45 = vector.extract_strided_slice %9 {offsets = [8, 0], sizes = [1, 512], strides = [1, 1]} : vector<9x512xf32> to vector<1x512xf32>
    %46 = vector.broadcast %45 : vector<1x512xf32> to vector<4x512xf32>
    %47 = arith.mulf %44, %46 : vector<4x512xf32>
    %48 = tpu.concatenate %15, %19, %23, %27, %31, %35, %39, %43, %47 in 0 : vector<4x512xf32>, vector<4x512xf32>, vector<4x512xf32>, vector<4x512xf32>, vector<4x512xf32>, vector<4x512xf32>, vector<4x512xf32>, vector<4x512xf32>, vector<4x512xf32> -> vector<36x512xf32>
    %49 = arith.truncf %48 : vector<36x512xf32> to vector<36x512xbf16>
    %c0_8 = arith.constant 0 : index
    %c0_9 = arith.constant 0 : index
    %50 = vector.load %arg6[%c0_8, %c0_9] : memref<8x36xbf16, #tpu.memory_space<vmem>>, vector<8x36xbf16>
    %cst_10 = arith.constant dense<0.000000e+00> : vector<8x512xf32>
    %51 = tpu.matmul %50, %49, %cst_10 {dimension_numbers = #tpu.dot_dimension_numbers<[1], [0], [0], [1], [0, 0, 1, 1], [], []>} : vector<8x36xbf16>, vector<36x512xbf16>, vector<8x512xf32> -> vector<8x512xf32>
    %c0_11 = arith.constant 0 : index
    %c0_12 = arith.constant 0 : index
    %52 = vector.load %arg10[%c0_11, %c0_12] : memref<512x128xbf16, #tpu.memory_space<vmem>>, vector<512x128xbf16>
    %53 = arith.truncf %51 : vector<8x512xf32> to vector<8x512xbf16>
    %cst_13 = arith.constant dense<0.000000e+00> : vector<8x128xf32>
    %54 = tpu.matmul %53, %52, %cst_13 {dimension_numbers = #tpu.dot_dimension_numbers<[1], [0], [0], [1], [0, 0, 1, 1], [], []>} : vector<8x512xbf16>, vector<512x128xbf16>, vector<8x128xf32> -> vector<8x128xf32>
    %55 = arith.truncf %8 : vector<4x512xf32> to vector<4x512xbf16>
    %cst_14 = arith.constant dense<0.000000e+00> : vector<4x128xf32>
    %56 = tpu.matmul %55, %52, %cst_14 {dimension_numbers = #tpu.dot_dimension_numbers<[1], [0], [0], [1], [0, 0, 1, 1], [], []>} : vector<4x512xbf16>, vector<512x128xbf16>, vector<4x128xf32> -> vector<4x128xf32>
    %c0_15 = arith.constant 0 : index
    %c0_16 = arith.constant 0 : index
    %57 = vector.load %arg11[%c0_15, %c0_16] : memref<8x4xbf16, #tpu.memory_space<vmem>>, vector<8x4xbf16>
    %58 = arith.truncf %56 : vector<4x128xf32> to vector<4x128xbf16>
    %cst_17 = arith.constant dense<0.000000e+00> : vector<8x128xf32>
    %59 = tpu.matmul %57, %58, %cst_17 {dimension_numbers = #tpu.dot_dimension_numbers<[1], [0], [0], [1], [0, 0, 1, 1], [], []>} : vector<8x4xbf16>, vector<4x128xbf16>, vector<8x128xf32> -> vector<8x128xf32>
    %c0_18 = arith.constant 0 : index
    %c0_19 = arith.constant 0 : index
    %60 = vector.load %arg4[%c0_18, %c0_19] : memref<8x1xf32, #tpu.memory_space<vmem>>, vector<8x1xf32>
    %61 = vector.broadcast %60 : vector<8x1xf32> to vector<8x128xf32>
    %62 = arith.mulf %54, %61 : vector<8x128xf32>
    %c0_20 = arith.constant 0 : index
    %c0_21 = arith.constant 0 : index
    %63 = vector.load %arg5[%c0_20, %c0_21] : memref<8x1xf32, #tpu.memory_space<vmem>>, vector<8x1xf32>
    %64 = vector.broadcast %63 : vector<8x1xf32> to vector<8x128xf32>
    %65 = arith.addf %62, %64 : vector<8x128xf32>
    %cst_22 = arith.constant 0.000000e+00 : f32
    %66 = vector.broadcast %cst_22 : f32 to vector<8x128xf32>
    %67 = arith.maximumf %65, %66 : vector<8x128xf32>
    %c0_23 = arith.constant 0 : index
    %c0_24 = arith.constant 0 : index
    %68 = vector.load %arg9[%c0_23, %c0_24] : memref<9x128xf32, #tpu.memory_space<vmem>>, vector<9x128xf32>
    %cst_25 = arith.constant 0.000000e+00 : f32
    %69 = vector.broadcast %cst_25 : f32 to vector<8x9xf32>
    %70 = tpu.concatenate %69, %67, %69 in 1 : vector<8x9xf32>, vector<8x128xf32>, vector<8x9xf32> -> vector<8x146xf32>
    %71 = vector.extract_strided_slice %70 {offsets = [0, 0], sizes = [8, 128], strides = [1, 1]} : vector<8x146xf32> to vector<8x128xf32>
    %72 = vector.extract_strided_slice %68 {offsets = [0, 0], sizes = [1, 128], strides = [1, 1]} : vector<9x128xf32> to vector<1x128xf32>
    %73 = vector.broadcast %72 : vector<1x128xf32> to vector<8x128xf32>
    %74 = arith.mulf %71, %73 : vector<8x128xf32>
    %75 = vector.extract_strided_slice %70 {offsets = [0, 1], sizes = [8, 128], strides = [1, 1]} : vector<8x146xf32> to vector<8x128xf32>
    %76 = vector.extract_strided_slice %68 {offsets = [1, 0], sizes = [1, 128], strides = [1, 1]} : vector<9x128xf32> to vector<1x128xf32>
    %77 = vector.broadcast %76 : vector<1x128xf32> to vector<8x128xf32>
    %78 = arith.mulf %75, %77 : vector<8x128xf32>
    %79 = vector.extract_strided_slice %70 {offsets = [0, 2], sizes = [8, 128], strides = [1, 1]} : vector<8x146xf32> to vector<8x128xf32>
    %80 = vector.extract_strided_slice %68 {offsets = [2, 0], sizes = [1, 128], strides = [1, 1]} : vector<9x128xf32> to vector<1x128xf32>
    %81 = vector.broadcast %80 : vector<1x128xf32> to vector<8x128xf32>
    %82 = arith.mulf %79, %81 : vector<8x128xf32>
    %83 = vector.extract_strided_slice %70 {offsets = [0, 8], sizes = [8, 128], strides = [1, 1]} : vector<8x146xf32> to vector<8x128xf32>
    %84 = vector.extract_strided_slice %68 {offsets = [3, 0], sizes = [1, 128], strides = [1, 1]} : vector<9x128xf32> to vector<1x128xf32>
    %85 = vector.broadcast %84 : vector<1x128xf32> to vector<8x128xf32>
    %86 = arith.mulf %83, %85 : vector<8x128xf32>
    %87 = vector.extract_strided_slice %70 {offsets = [0, 9], sizes = [8, 128], strides = [1, 1]} : vector<8x146xf32> to vector<8x128xf32>
    %88 = vector.extract_strided_slice %68 {offsets = [4, 0], sizes = [1, 128], strides = [1, 1]} : vector<9x128xf32> to vector<1x128xf32>
    %89 = vector.broadcast %88 : vector<1x128xf32> to vector<8x128xf32>
    %90 = arith.mulf %87, %89 : vector<8x128xf32>
    %91 = vector.extract_strided_slice %70 {offsets = [0, 10], sizes = [8, 128], strides = [1, 1]} : vector<8x146xf32> to vector<8x128xf32>
    %92 = vector.extract_strided_slice %68 {offsets = [5, 0], sizes = [1, 128], strides = [1, 1]} : vector<9x128xf32> to vector<1x128xf32>
    %93 = vector.broadcast %92 : vector<1x128xf32> to vector<8x128xf32>
    %94 = arith.mulf %91, %93 : vector<8x128xf32>
    %95 = vector.extract_strided_slice %70 {offsets = [0, 16], sizes = [8, 128], strides = [1, 1]} : vector<8x146xf32> to vector<8x128xf32>
    %96 = vector.extract_strided_slice %68 {offsets = [6, 0], sizes = [1, 128], strides = [1, 1]} : vector<9x128xf32> to vector<1x128xf32>
    %97 = vector.broadcast %96 : vector<1x128xf32> to vector<8x128xf32>
    %98 = arith.mulf %95, %97 : vector<8x128xf32>
    %99 = vector.extract_strided_slice %70 {offsets = [0, 17], sizes = [8, 128], strides = [1, 1]} : vector<8x146xf32> to vector<8x128xf32>
    %100 = vector.extract_strided_slice %68 {offsets = [7, 0], sizes = [1, 128], strides = [1, 1]} : vector<9x128xf32> to vector<1x128xf32>
    %101 = vector.broadcast %100 : vector<1x128xf32> to vector<8x128xf32>
    %102 = arith.mulf %99, %101 : vector<8x128xf32>
    %103 = vector.extract_strided_slice %70 {offsets = [0, 18], sizes = [8, 128], strides = [1, 1]} : vector<8x146xf32> to vector<8x128xf32>
    %104 = vector.extract_strided_slice %68 {offsets = [8, 0], sizes = [1, 128], strides = [1, 1]} : vector<9x128xf32> to vector<1x128xf32>
    %105 = vector.broadcast %104 : vector<1x128xf32> to vector<8x128xf32>
    %106 = arith.mulf %103, %105 : vector<8x128xf32>
    %107 = tpu.concatenate %74, %78, %82, %86, %90, %94, %98, %102, %106 in 0 : vector<8x128xf32>, vector<8x128xf32>, vector<8x128xf32>, vector<8x128xf32>, vector<8x128xf32>, vector<8x128xf32>, vector<8x128xf32>, vector<8x128xf32>, vector<8x128xf32> -> vector<72x128xf32>
    %108 = arith.truncf %107 : vector<72x128xf32> to vector<72x128xbf16>
    %c0_26 = arith.constant 0 : index
    %c0_27 = arith.constant 0 : index
    %109 = vector.load %arg7[%c0_26, %c0_27] : memref<8x72xbf16, #tpu.memory_space<vmem>>, vector<8x72xbf16>
    %cst_28 = arith.constant dense<0.000000e+00> : vector<8x128xf32>
    %110 = tpu.matmul %109, %108, %cst_28 {dimension_numbers = #tpu.dot_dimension_numbers<[1], [0], [0], [1], [0, 0, 1, 1], [], []>} : vector<8x72xbf16>, vector<72x128xbf16>, vector<8x128xf32> -> vector<8x128xf32>
    %111 = arith.addf %110, %59 : vector<8x128xf32>
    %c0_29 = arith.constant 0 : index
    %c0_30 = arith.constant 0 : index
    %112 = vector.load %arg12[%c0_29, %c0_30] : memref<8x128xf32, #tpu.memory_space<vmem>>, vector<8x128xf32>
    tpu.vector_store %arg12[%c0_29, %c0_30], %111 {strides = array<i32>} : memref<8x128xf32, #tpu.memory_space<vmem>>, vector<8x128xf32>,
    return
  }
  func.func @transform_0(%arg0: i32) -> (i32, i32) {
    %c0_i32 = arith.constant 0 : i32
    %c0_i32_0 = arith.constant 0 : i32
    return %c0_i32, %arg0 : i32, i32
  }
  func.func @transform_1(%arg0: i32) -> (i32, i32) {
    %c0_i32 = arith.constant 0 : i32
    %c0_i32_0 = arith.constant 0 : i32
    %c0_i32_1 = arith.constant 0 : i32
    return %c0_i32, %c0_i32_0 : i32, i32
  }
  func.func @transform_2(%arg0: i32) -> (i32, i32) {
    %c0_i32 = arith.constant 0 : i32
    %c0_i32_0 = arith.constant 0 : i32
    %c0_i32_1 = arith.constant 0 : i32
    return %c0_i32, %c0_i32_0 : i32, i32
  }
  func.func @transform_3(%arg0: i32) -> (i32, i32) {
    %c0_i32 = arith.constant 0 : i32
    %c0_i32_0 = arith.constant 0 : i32
    %c0_i32_1 = arith.constant 0 : i32
    return %c0_i32, %c0_i32_0 : i32, i32
  }
  func.func @transform_4(%arg0: i32) -> (i32, i32) {
    %c0_i32 = arith.constant 0 : i32
    %c0_i32_0 = arith.constant 0 : i32
    %c0_i32_1 = arith.constant 0 : i32
    return %c0_i32, %c0_i32_0 : i32, i32
  }
  func.func @transform_5(%arg0: i32) -> (i32, i32) {
    %c0_i32 = arith.constant 0 : i32
    %c0_i32_0 = arith.constant 0 : i32
    %c0_i32_1 = arith.constant 0 : i32
    return %c0_i32, %c0_i32_0 : i32, i32
  }
  func.func @transform_6(%arg0: i32) -> (i32, i32) {
    %c0_i32 = arith.constant 0 : i32
    %c0_i32_0 = arith.constant 0 : i32
    %c0_i32_1 = arith.constant 0 : i32
    return %c0_i32, %c0_i32_0 : i32, i32
  }
  func.func @transform_7(%arg0: i32) -> (i32, i32) {
    %c0_i32 = arith.constant 0 : i32
    %c0_i32_0 = arith.constant 0 : i32
    %c0_i32_1 = arith.constant 0 : i32
    return %c0_i32, %c0_i32_0 : i32, i32
  }
  func.func @transform_8(%arg0: i32) -> (i32, i32) {
    %c0_i32 = arith.constant 0 : i32
    %c0_i32_0 = arith.constant 0 : i32
    %c0_i32_1 = arith.constant 0 : i32
    return %c0_i32, %c0_i32_0 : i32, i32
  }
  func.func @transform_9(%arg0: i32) -> (i32, i32) {
    %c0_i32 = arith.constant 0 : i32
    %c0_i32_0 = arith.constant 0 : i32
    %c0_i32_1 = arith.constant 0 : i32
    return %c0_i32, %c0_i32_0 : i32, i32
  }
  func.func @transform_10(%arg0: i32) -> (i32, i32) {
    %c0_i32 = arith.constant 0 : i32
    %c0_i32_0 = arith.constant 0 : i32
    %c0_i32_1 = arith.constant 0 : i32
    return %c0_i32, %c0_i32_0 : i32, i32
  }
  func.func @transform_11(%arg0: i32) -> (i32, i32) {
    %c0_i32 = arith.constant 0 : i32
    %c0_i32_0 = arith.constant 0 : i32
    return %c0_i32, %arg0 : i32, i32
  }
}

</mosaic_0001>

<llo_original>
// kernel: tpu_custom_call.1
$region0: #{tpu_custom_call.1}
  #allocation0 [shape = 'u32[]', space=smem, size = 0x4, offset = 0x4, fixed_abs, tag = 'smem constant byte address 0x4 - core index']
  #allocation1 [shape = 'u32[144,128]{1,0:T(1,128)}', space=vmem, size = 0x12000, scoped, tag = 'internal scratch']
  %s0 = inlined_call_operand.vmem [shape: f32[4,1024], index: 0, kind: input, shape index: {}]
  %s1 = inlined_call_operand.vmem [shape: f32[4,1], index: 1, kind: input, shape index: {}]
  %s2 = inlined_call_operand.vmem [shape: f32[4,1], index: 2, kind: input, shape index: {}]
  %s3 = inlined_call_operand.vmem [shape: f32[8,1], index: 3, kind: input, shape index: {}]
  %s4 = inlined_call_operand.vmem [shape: f32[8,1], index: 4, kind: input, shape index: {}]
  %s5 = inlined_call_operand.hbm [shape: bf16[8,36], index: 5, kind: input, shape index: {}]
  %s6 = inlined_call_operand.hbm [shape: bf16[8,72], index: 6, kind: input, shape index: {}]
  %s7 = inlined_call_operand.hbm [shape: f32[9,512], index: 7, kind: input, shape index: {}]
  %s8 = inlined_call_operand.vmem [shape: f32[9,128], index: 8, kind: input, shape index: {}]
  %s9 = inlined_call_operand.hbm [shape: bf16[512,128], index: 9, kind: input, shape index: {}]
  %s10 = inlined_call_operand.vmem [shape: bf16[8,4], index: 10, kind: input, shape index: {}]
  %s11 = inlined_call_operand.hbm [shape: f32[8,256], index: 11, kind: output, shape index: {}]
  %s12 = sld [smem:[#allocation0]]
  $region93: #{tpu_custom_call.1} parent=0
    _
  %s14 = ssub.s32 1, %s12
  %s15 = scalar_select 0, %s14, %s12
  $region1: #{tpu_custom_call.1} parent=0
    #allocation2 [shape = 'u8[2048]{0}', space=vmem, size = 0x800, scoped, tag = 'input window, operand 5, single buffered']
    #allocation3 [shape = 's32[2]{0}', space=sflag, size = 0x8, scoped, tag = 'scoped memory for tpu_custom_call.1']
    #allocation4 [shape = 's32[2]{0}', space=sflag, size = 0x8, scoped, tag = 'scoped memory for tpu_custom_call.1']
    #allocation5 [shape = 'u8[2048]{0}', space=vmem, size = 0x800, scoped, tag = 'input window, operand 6, single buffered']
    #allocation6 [shape = 's32[1]{0}', space=sflag, size = 0x4, scoped, tag = 'scoped memory for tpu_custom_call.1']
    #allocation7 [shape = 'u8[32768]{0}', space=vmem, size = 0x8000, scoped, tag = 'input window, operand 7, single buffered']
    #allocation8 [shape = 'u8[131072]{0}', space=vmem, size = 0x20000, scoped, tag = 'input window, operand 9, single buffered']
    #allocation9 [shape = 's32[1]{0}', space=sflag, size = 0x4, scoped, tag = 'scoped memory for tpu_custom_call.1']
    #allocation10 [shape = 'u8[8192]{0}', space=vmem, size = 0x2000, scoped, tag = 'output window, operand 0']
    %16 = vsyncpa [#allocation3], 0
    %17 = vsyncpa [#allocation6], 0
    %18 = vsyncpa [#allocation9], 0
    %19 = vsyncpa [#allocation4], 0
    %s20 = scalar_lea.sflag [#allocation4], 1
    %21 = vsyncpa %s20, 0
    loop: start=0, step=1, limit=4
    $region2: #{tpu_custom_call.1} parent=1 // loop_pre_header
      _
    $region3: #{tpu_custom_call.1} parent=1 // loop_header
      %s23 = sphi 0, %s27
      %p24 = scmp.ge.s32.totalorder %s23, 4
      %s33 = sphi 0, %s35
      %s36 = sphi 0, %s33
      %s37 = sphi 0, %s36
      %s53 = sphi 0, %s37
      %s57 = sphi 0, %s57
      %s59 = sphi 0, %s57
      %s60 = sphi 0, %s59
      %s74 = sphi 0, %s60
      %s78 = sphi 0, %s78
      %s80 = sphi 0, %s78
      %s81 = sphi 0, %s80
      %s95 = sphi 0, %s81
      %s99 = sphi 0, %s99
      %s101 = sphi 0, %s99
      %s102 = sphi 0, %s101
      %s116 = sphi 0, %s102
      %s120 = sphi 0, %s120
      %s122 = sphi 0, %s120
      %s123 = sphi 0, %s122
      %s137 = sphi 0, %s123
      %s141 = sphi 0, %s141
      %s143 = sphi 0, %s141
      %s144 = sphi 0, %s143
      %s158 = sphi 0, %s144
      %s162 = sphi 0, %s162
      %s164 = sphi 0, %s162
      %s165 = sphi 0, %s164
      %s179 = sphi 0, %s165
      %s183 = sphi 0, %s183
      %s185 = sphi 0, %s183
      %s186 = sphi 0, %s185
      %s200 = sphi 0, %s186
      %s204 = sphi 0, %s204
      %s206 = sphi 0, %s204
      %s207 = sphi 0, %s206
      %s221 = sphi 0, %s207
      %s225 = sphi 0, %s225
      %s227 = sphi 0, %s225
      %s228 = sphi 0, %s227
      %s242 = sphi 0, %s228
      %s246 = sphi 0, %s246
      %s248 = sphi 0, %s246
      %s249 = sphi 0, %s248
      %s263 = sphi 0, %s249
      %s269 = sphi 0, %s271
      %s272 = sphi 0, %s269
      %s273 = sphi 0, %s272
      %s289 = sphi 0, %s273
    $region4: #{tpu_custom_call.1} parent=1 // loop_header_branch
      %26 = sbr.rel (%p24) target = $region8
    $region5: #{tpu_custom_call.1} parent=1 // loop_body
      %s28 = ssub.s32 %s23, 1
      %s29 = ssub.s32 %s23, 2
      %s30 = sadd.s32 %s23, 1
      %s31 = ssub.s32 %s23, %s30
      %p32 = scmp.eq.s32.totalorder %s31, 0
      %s34 = sadd.s32 %s33, 1
      %s35 = scalar_select %p32, %s33, %s34
      %p38 = pneg %p32
      %p39 = scmp.eq.s32.totalorder %s23, 1
      %p40 = por %p38, %p39
      %p41 = scmp.ne.s32.totalorder %s33, %s36
      %p42 = scmp.eq.s32.totalorder %s23, 0
      %p43 = por %p41, %p42
      %p44 = scmp.ne.s32.totalorder %s33, %s36
      %p45 = scmp.eq.s32.totalorder %s28, 1
      %p46 = por %p44, %p45
      %p47 = scmp.ne.s32.totalorder %s36, %s37
      %p48 = scmp.eq.s32.totalorder %s28, 0
      %p49 = por %p47, %p48
      %p50 = scmp.ne.s32.totalorder %s36, %s37
      %p51 = scmp.eq.s32.totalorder %s29, 1
      %p52 = por %p50, %p51
      %p54 = scmp.ne.s32.totalorder %s37, %s53
      %p55 = scmp.eq.s32.totalorder %s29, 0
      %p56 = por %p54, %p55
      %s58 = sadd.s32 %s57, 1
      %p61 = scmp.eq.s32.totalorder %s23, 1
      %p62 = scmp.ne.s32.totalorder %s57, %s59
      %p63 = scmp.eq.s32.totalorder %s23, 0
      %p64 = por %p62, %p63
      %p65 = scmp.ne.s32.totalorder %s57, %s59
      %p66 = scmp.eq.s32.totalorder %s28, 1
      %p67 = por %p65, %p66
      %p68 = scmp.ne.s32.totalorder %s59, %s60
      %p69 = scmp.eq.s32.totalorder %s28, 0
      %p70 = por %p68, %p69
      %p71 = scmp.ne.s32.totalorder %s59, %s60
      %p72 = scmp.eq.s32.totalorder %s29, 1
      %p73 = por %p71, %p72
      %p75 = scmp.ne.s32.totalorder %s60, %s74
      %p76 = scmp.eq.s32.totalorder %s29, 0
      %p77 = por %p75, %p76
      %s79 = sadd.s32 %s78, 1
      %p82 = scmp.eq.s32.totalorder %s23, 1
      %p83 = scmp.ne.s32.totalorder %s78, %s80
      %p84 = scmp.eq.s32.totalorder %s23, 0
      %p85 = por %p83, %p84
      %p86 = scmp.ne.s32.totalorder %s78, %s80
      %p87 = scmp.eq.s32.totalorder %s28, 1
      %p88 = por %p86, %p87
      %p89 = scmp.ne.s32.totalorder %s80, %s81
      %p90 = scmp.eq.s32.totalorder %s28, 0
      %p91 = por %p89, %p90
      %p92 = scmp.ne.s32.totalorder %s80, %s81
      %p93 = scmp.eq.s32.totalorder %s29, 1
      %p94 = por %p92, %p93
      %p96 = scmp.ne.s32.totalorder %s81, %s95
      %p97 = scmp.eq.s32.totalorder %s29, 0
      %p98 = por %p96, %p97
      %s100 = sadd.s32 %s99, 1
      %p103 = scmp.eq.s32.totalorder %s23, 1
      %p104 = scmp.ne.s32.totalorder %s99, %s101
      %p105 = scmp.eq.s32.totalorder %s23, 0
      %p106 = por %p104, %p105
      %p107 = scmp.ne.s32.totalorder %s99, %s101
      %p108 = scmp.eq.s32.totalorder %s28, 1
      %p109 = por %p107, %p108
      %p110 = scmp.ne.s32.totalorder %s101, %s102
      %p111 = scmp.eq.s32.totalorder %s28, 0
      %p112 = por %p110, %p111
      %p113 = scmp.ne.s32.totalorder %s101, %s102
      %p114 = scmp.eq.s32.totalorder %s29, 1
      %p115 = por %p113, %p114
      %p117 = scmp.ne.s32.totalorder %s102, %s116
      %p118 = scmp.eq.s32.totalorder %s29, 0
      %p119 = por %p117, %p118
      %s121 = sadd.s32 %s120, 1
      %p124 = scmp.eq.s32.totalorder %s23, 1
      %p125 = scmp.ne.s32.totalorder %s120, %s122
      %p126 = scmp.eq.s32.totalorder %s23, 0
      %p127 = por %p125, %p126
      %p128 = scmp.ne.s32.totalorder %s120, %s122
      %p129 = scmp.eq.s32.totalorder %s28, 1
      %p130 = por %p128, %p129
      %p131 = scmp.ne.s32.totalorder %s122, %s123
      %p132 = scmp.eq.s32.totalorder %s28, 0
      %p133 = por %p131, %p132
      %p134 = scmp.ne.s32.totalorder %s122, %s123
      %p135 = scmp.eq.s32.totalorder %s29, 1
      %p136 = por %p134, %p135
      %p138 = scmp.ne.s32.totalorder %s123, %s137
      %p139 = scmp.eq.s32.totalorder %s29, 0
      %p140 = por %p138, %p139
      %s142 = sadd.s32 %s141, 1
      %p145 = scmp.eq.s32.totalorder %s23, 1
      %p146 = scmp.ne.s32.totalorder %s141, %s143
      %p147 = scmp.eq.s32.totalorder %s23, 0
      %p148 = por %p146, %p147
      %p149 = scmp.ne.s32.totalorder %s141, %s143
      %p150 = scmp.eq.s32.totalorder %s28, 1
      %p151 = por %p149, %p150
      %p152 = scmp.ne.s32.totalorder %s143, %s144
      %p153 = scmp.eq.s32.totalorder %s28, 0
      %p154 = por %p152, %p153
      %p155 = scmp.ne.s32.totalorder %s143, %s144
      %p156 = scmp.eq.s32.totalorder %s29, 1
      %p157 = por %p155, %p156
      %p159 = scmp.ne.s32.totalorder %s144, %s158
      %p160 = scmp.eq.s32.totalorder %s29, 0
      %p161 = por %p159, %p160
      %s163 = sadd.s32 %s162, 1
      %p166 = scmp.eq.s32.totalorder %s23, 1
      %p167 = scmp.ne.s32.totalorder %s162, %s164
      %p168 = scmp.eq.s32.totalorder %s23, 0
      %p169 = por %p167, %p168
      %p170 = scmp.ne.s32.totalorder %s162, %s164
      %p171 = scmp.eq.s32.totalorder %s28, 1
      %p172 = por %p170, %p171
      %p173 = scmp.ne.s32.totalorder %s164, %s165
      %p174 = scmp.eq.s32.totalorder %s28, 0
      %p175 = por %p173, %p174
      %p176 = scmp.ne.s32.totalorder %s164, %s165
      %p177 = scmp.eq.s32.totalorder %s29, 1
      %p178 = por %p176, %p177
      %p180 = scmp.ne.s32.totalorder %s165, %s179
      %p181 = scmp.eq.s32.totalorder %s29, 0
      %p182 = por %p180, %p181
      %s184 = sadd.s32 %s183, 1
      %p187 = scmp.eq.s32.totalorder %s23, 1
      %p188 = scmp.ne.s32.totalorder %s183, %s185
      %p189 = scmp.eq.s32.totalorder %s23, 0
      %p190 = por %p188, %p189
      %p191 = scmp.ne.s32.totalorder %s183, %s185
      %p192 = scmp.eq.s32.totalorder %s28, 1
      %p193 = por %p191, %p192
      %p194 = scmp.ne.s32.totalorder %s185, %s186
      %p195 = scmp.eq.s32.totalorder %s28, 0
      %p196 = por %p194, %p195
      %p197 = scmp.ne.s32.totalorder %s185, %s186
      %p198 = scmp.eq.s32.totalorder %s29, 1
      %p199 = por %p197, %p198
      %p201 = scmp.ne.s32.totalorder %s186, %s200
      %p202 = scmp.eq.s32.totalorder %s29, 0
      %p203 = por %p201, %p202
      %s205 = sadd.s32 %s204, 1
      %p208 = scmp.eq.s32.totalorder %s23, 1
      %p209 = scmp.ne.s32.totalorder %s204, %s206
      %p210 = scmp.eq.s32.totalorder %s23, 0
      %p211 = por %p209, %p210
      %p212 = scmp.ne.s32.totalorder %s204, %s206
      %p213 = scmp.eq.s32.totalorder %s28, 1
      %p214 = por %p212, %p213
      %p215 = scmp.ne.s32.totalorder %s206, %s207
      %p216 = scmp.eq.s32.totalorder %s28, 0
      %p217 = por %p215, %p216
      %p218 = scmp.ne.s32.totalorder %s206, %s207
      %p219 = scmp.eq.s32.totalorder %s29, 1
      %p220 = por %p218, %p219
      %p222 = scmp.ne.s32.totalorder %s207, %s221
      %p223 = scmp.eq.s32.totalorder %s29, 0
      %p224 = por %p222, %p223
      %s226 = sadd.s32 %s225, 1
      %p229 = scmp.eq.s32.totalorder %s23, 1
      %p230 = scmp.ne.s32.totalorder %s225, %s227
      %p231 = scmp.eq.s32.totalorder %s23, 0
      %p232 = por %p230, %p231
      %p233 = scmp.ne.s32.totalorder %s225, %s227
      %p234 = scmp.eq.s32.totalorder %s28, 1
      %p235 = por %p233, %p234
      %p236 = scmp.ne.s32.totalorder %s227, %s228
      %p237 = scmp.eq.s32.totalorder %s28, 0
      %p238 = por %p236, %p237
      %p239 = scmp.ne.s32.totalorder %s227, %s228
      %p240 = scmp.eq.s32.totalorder %s29, 1
      %p241 = por %p239, %p240
      %p243 = scmp.ne.s32.totalorder %s228, %s242
      %p244 = scmp.eq.s32.totalorder %s29, 0
      %p245 = por %p243, %p244
      %s247 = sadd.s32 %s246, 1
      %p250 = scmp.eq.s32.totalorder %s23, 1
      %p251 = scmp.ne.s32.totalorder %s246, %s248
      %p252 = scmp.eq.s32.totalorder %s23, 0
      %p253 = por %p251, %p252
      %p254 = scmp.ne.s32.totalorder %s246, %s248
      %p255 = scmp.eq.s32.totalorder %s28, 1
      %p256 = por %p254, %p255
      %p257 = scmp.ne.s32.totalorder %s248, %s249
      %p258 = scmp.eq.s32.totalorder %s28, 0
      %p259 = por %p257, %p258
      %p260 = scmp.ne.s32.totalorder %s248, %s249
      %p261 = scmp.eq.s32.totalorder %s29, 1
      %p262 = por %p260, %p261
      %p264 = scmp.ne.s32.totalorder %s249, %s263
      %p265 = scmp.eq.s32.totalorder %s29, 0
      %p266 = por %p264, %p265
      %s267 = ssub.s32 %s23, %s30
      %p268 = scmp.eq.s32.totalorder %s267, 0
      %s270 = sadd.s32 %s269, 1
      %s271 = scalar_select %p268, %s269, %s270
      %p274 = pneg %p268
      %p275 = scmp.eq.s32.totalorder %s23, 1
      %p276 = por %p274, %p275
      %p277 = scmp.ne.s32.totalorder %s269, %s272
      %p278 = scmp.eq.s32.totalorder %s23, 0
      %p279 = por %p277, %p278
      %p280 = scmp.ne.s32.totalorder %s269, %s272
      %p281 = scmp.eq.s32.totalorder %s28, 1
      %p282 = por %p280, %p281
      %p283 = scmp.ne.s32.totalorder %s272, %s273
      %p284 = scmp.eq.s32.totalorder %s28, 0
      %p285 = por %p283, %p284
      %p286 = scmp.ne.s32.totalorder %s272, %s273
      %p287 = scmp.eq.s32.totalorder %s29, 1
      %p288 = por %p286, %p287
      %p290 = scmp.ne.s32.totalorder %s273, %s289
      %p291 = scmp.eq.s32.totalorder %s29, 0
      %p292 = por %p290, %p291
      %p293 = scmp.le.s32.totalorder 1, %s23
      %p294 = scmp.lt.s32.totalorder %s23, 3
      %p295 = pnand %p293, %p294
      %p296 = pneg %p295
      // Predicated region
      $region9: #{tpu_custom_call.1} parent=5 // pred_check
        _
      $region10: #{tpu_custom_call.1} parent=5 // pred_check_branch
        %298 = sbr.rel (%p295) target = $region12
      $region11: #{tpu_custom_call.1} parent=5 // pred_region
        %s299 = ssub.s32 %s23, 1
        // Predicated region
        $region13: #{tpu_custom_call.1} parent=11 // pred_check
          %p300 = pneg %p70
        $region14: #{tpu_custom_call.1} parent=11 // pred_check_branch
          %302 = sbr.rel (%p300) target = $region16
        $region15: #{tpu_custom_call.1} parent=11 // pred_region
          _
        $region16: #{tpu_custom_call.1} parent=11 // pred_fallthru
          _
        // Predicated region
        $region17: #{tpu_custom_call.1} parent=11 // pred_check
          %p303 = pneg %p91
        $region18: #{tpu_custom_call.1} parent=11 // pred_check_branch
          %305 = sbr.rel (%p303) target = $region20
        $region19: #{tpu_custom_call.1} parent=11 // pred_region
          _
        $region20: #{tpu_custom_call.1} parent=11 // pred_fallthru
          _
        // Predicated region
        $region21: #{tpu_custom_call.1} parent=11 // pred_check
          %p306 = pneg %p112
        $region22: #{tpu_custom_call.1} parent=11 // pred_check_branch
          %308 = sbr.rel (%p306) target = $region24
        $region23: #{tpu_custom_call.1} parent=11 // pred_region
          _
        $region24: #{tpu_custom_call.1} parent=11 // pred_fallthru
          _
        // Predicated region
        $region25: #{tpu_custom_call.1} parent=11 // pred_check
          %p309 = pneg %p133
        $region26: #{tpu_custom_call.1} parent=11 // pred_check_branch
          %311 = sbr.rel (%p309) target = $region28
        $region27: #{tpu_custom_call.1} parent=11 // pred_region
          _
        $region28: #{tpu_custom_call.1} parent=11 // pred_fallthru
          _
        // Predicated region
        $region29: #{tpu_custom_call.1} parent=11 // pred_check
          %p312 = pneg %p154
        $region30: #{tpu_custom_call.1} parent=11 // pred_check_branch
          %314 = sbr.rel (%p312) target = $region32
        $region31: #{tpu_custom_call.1} parent=11 // pred_region
          %s316 = ssub.s32 64, 64
          %317 = vsyncadd [#allocation3], %s316
          %s319 = sshll.u32 [#allocation2], 4
          %s320 = int_to_ptr.vmem [resolvable:$true] %s319
          %322 = dma.hbm_to_vmem [thread:$0]  %s5, 64, %s320, [#allocation3]
        $region32: #{tpu_custom_call.1} parent=11 // pred_fallthru
          _
        // Predicated region
        $region33: #{tpu_custom_call.1} parent=11 // pred_check
          %p323 = pneg %p175
        $region34: #{tpu_custom_call.1} parent=11 // pred_check_branch
          %325 = sbr.rel (%p323) target = $region36
        $region35: #{tpu_custom_call.1} parent=11 // pred_region
          %s327 = ssub.s32 64, 64
          %328 = vsyncadd [#allocation6], %s327
          %s330 = sshll.u32 [#allocation5], 4
          %s331 = int_to_ptr.vmem [resolvable:$true] %s330
          %333 = dma.hbm_to_vmem [thread:$0]  %s6, 64, %s331, [#allocation6]
        $region36: #{tpu_custom_call.1} parent=11 // pred_fallthru
          _
        // Predicated region
        $region37: #{tpu_custom_call.1} parent=11 // pred_check
          %p334 = pneg %p196
        $region38: #{tpu_custom_call.1} parent=11 // pred_check_branch
          %336 = sbr.rel (%p334) target = $region40
        $region39: #{tpu_custom_call.1} parent=11 // pred_region
          %s338 = ssub.s32 1024, 1024
          %339 = vsyncadd [#allocation6], %s338
          %s340 = sshll.u32 [#allocation7], 4
          %s341 = int_to_ptr.vmem [resolvable:$true] %s340
          %346 = dma.hbm_to_vmem [thread:$0]  %s7, 1024, %s341, [#allocation6], 512, 512, 32
        $region40: #{tpu_custom_call.1} parent=11 // pred_fallthru
          _
        // Predicated region
        $region41: #{tpu_custom_call.1} parent=11 // pred_check
          %p347 = pneg %p217
        $region42: #{tpu_custom_call.1} parent=11 // pred_check_branch
          %349 = sbr.rel (%p347) target = $region44
        $region43: #{tpu_custom_call.1} parent=11 // pred_region
          _
        $region44: #{tpu_custom_call.1} parent=11 // pred_fallthru
          _
        // Predicated region
        $region45: #{tpu_custom_call.1} parent=11 // pred_check
          %p350 = pneg %p238
        $region46: #{tpu_custom_call.1} parent=11 // pred_check_branch
          %352 = sbr.rel (%p350) target = $region48
        $region47: #{tpu_custom_call.1} parent=11 // pred_region
          %s354 = ssub.s32 4096, 4096
          %355 = vsyncadd [#allocation9], %s354
          %s356 = sshll.u32 [#allocation8], 4
          %s357 = int_to_ptr.vmem [resolvable:$true] %s356
          %362 = dma.hbm_to_vmem [thread:$0]  %s9, 4096, %s357, [#allocation9], 64, 64, 4
        $region48: #{tpu_custom_call.1} parent=11 // pred_fallthru
          _
        // Predicated region
        $region49: #{tpu_custom_call.1} parent=11 // pred_check
          %p363 = pneg %p259
        $region50: #{tpu_custom_call.1} parent=11 // pred_check_branch
          %365 = sbr.rel (%p363) target = $region52
        $region51: #{tpu_custom_call.1} parent=11 // pred_region
          _
        $region52: #{tpu_custom_call.1} parent=11 // pred_fallthru
          _
      $region12: #{tpu_custom_call.1} parent=5 // pred_fallthru
        _
      %p366 = scmp.lt.s32.totalorder %s23, 2
      // Predicated region
      $region53: #{tpu_custom_call.1} parent=5 // pred_check
        %p367 = pneg %p366
      $region54: #{tpu_custom_call.1} parent=5 // pred_check_branch
        %369 = sbr.rel (%p367) target = $region56
      $region55: #{tpu_custom_call.1} parent=5 // pred_region
        // Predicated region
        $region57: #{tpu_custom_call.1} parent=55 // pred_check
          %p370 = pneg %p43
        $region58: #{tpu_custom_call.1} parent=55 // pred_check_branch
          %372 = sbr.rel (%p370) target = $region60
        $region59: #{tpu_custom_call.1} parent=55 // pred_region
          %s373 = smul.u32 4, %s23
          %p374 = scmp.lt.s32.totalorder %s373, 7
          %s375 = scalar_select %p374, %s373, 7
          %s376 = smul.addr %s375, 4
          %s377 = scalar_lea.vmem %s0, %s376
          %s378 = smul.u32 4, %s23
        $region60: #{tpu_custom_call.1} parent=55 // pred_fallthru
          _
      $region56: #{tpu_custom_call.1} parent=5 // pred_fallthru
        _
      %p379 = scmp.le.s32.totalorder 1, %s23
      %p380 = scmp.lt.s32.totalorder %s23, 3
      %p381 = pnand %p379, %p380
      %p382 = pneg %p381
      // Predicated region
      $region61: #{tpu_custom_call.1} parent=5 // pred_check
        _
      $region62: #{tpu_custom_call.1} parent=5 // pred_check_branch
        %384 = sbr.rel (%p381) target = $region64
      $region63: #{tpu_custom_call.1} parent=5 // pred_region
        %s385 = ssub.s32 %s23, 1
        // Predicated region
        $region65: #{tpu_custom_call.1} parent=63 // pred_check
          %p386 = pneg %p154
        $region66: #{tpu_custom_call.1} parent=63 // pred_check_branch
          %388 = sbr.rel (%p386) target = $region68
        $region67: #{tpu_custom_call.1} parent=63 // pred_region
          %389 = dma.done [#allocation3], 64
        $region68: #{tpu_custom_call.1} parent=63 // pred_fallthru
          _
        // Predicated region
        $region69: #{tpu_custom_call.1} parent=63 // pred_check
          %p390 = pneg %p175
        $region70: #{tpu_custom_call.1} parent=63 // pred_check_branch
          %392 = sbr.rel (%p390) target = $region72
        $region71: #{tpu_custom_call.1} parent=63 // pred_region
          %393 = dma.done [#allocation6], 64
        $region72: #{tpu_custom_call.1} parent=63 // pred_fallthru
          _
        // Predicated region
        $region73: #{tpu_custom_call.1} parent=63 // pred_check
          %p394 = pneg %p196
        $region74: #{tpu_custom_call.1} parent=63 // pred_check_branch
          %396 = sbr.rel (%p394) target = $region76
        $region75: #{tpu_custom_call.1} parent=63 // pred_region
          %397 = dma.done [#allocation6], 1024
        $region76: #{tpu_custom_call.1} parent=63 // pred_fallthru
          _
        // Predicated region
        $region77: #{tpu_custom_call.1} parent=63 // pred_check
          %p398 = pneg %p238
        $region78: #{tpu_custom_call.1} parent=63 // pred_check_branch
          %400 = sbr.rel (%p398) target = $region80
        $region79: #{tpu_custom_call.1} parent=63 // pred_region
          %401 = dma.done [#allocation9], 4096
        $region80: #{tpu_custom_call.1} parent=63 // pred_fallthru
          _
        %s402 = smul.u32 4, %s28
        %p403 = scmp.lt.s32.totalorder %s402, 7
        %s404 = scalar_select %p403, %s402, 7
        %s405 = smul.addr %s404, 4
        %s406 = scalar_lea.vmem %s0, %s405
        %p407 = pneg %p49
        %p408 = pneg %p46
        %p409 = pneg %p70
        %p410 = pneg %p67
        %p411 = pneg %p91
        %p412 = pneg %p88
        %p413 = pneg %p112
        %p414 = pneg %p109
        %p415 = pneg %p133
        %p416 = pneg %p130
        %p417 = pneg %p154
        %p418 = pneg %p151
        %p419 = pneg %p175
        %p420 = pneg %p172
        %p421 = pneg %p196
        %p422 = pneg %p193
        %p423 = pneg %p217
        %p424 = pneg %p214
        %p425 = pneg %p238
        %p426 = pneg %p235
        %p427 = pneg %p259
        %p428 = pneg %p256
        %p429 = pneg %p285
        %p430 = pneg %p282
        %s431 = sand.u32 %s272, 1
        %s432 = scalar_lea.sflag [#allocation4], %s431
        %s433 = sand.u32 %s272, 1
        %s434 = smul.addr %s433, 8
        %s435 = scalar_lea.vmem [#allocation10], %s434
        %s436 = smul.u32 4, %s28
        %p437 = scmp.lt.s32.totalorder %s436, 7
        %s438 = scalar_select %p437, %s436, 7
        %s439 = smul.addr %s438, 4
        %s440 = scalar_lea.vmem %s0, %s439
        %s441 = smul.u32 4, %s28
        %v443 = vld [vmem:[%s440] sm:$0xff]
        %v444 = vld [vmem:[%s440 + $0x8] sm:$0xff]
        %v445 = vld [vmem:[%s1] sm:$0xf]
        %447 = vset.pattern.permute.xlu0 0
        %448 = vperm.xlu0 %447, %v445
        %v449 = vpop.permute.xlu0 %448
        %v451 = vunpack.c.l.s4 839922192
        %v452 = vunpack.c.0.s8 %v451
        %v453 = vlaneseq
        %v454 = vshrl.u32 %v453, 7
        %v455 = vsub.s32 %v452, %v454
        %v456 = vrot.slane %v449, %v455
        %v458 = vmul.f32 %v443, %v456
        %v459 = vmul.f32 %v444, %v456
        %v460 = vld [vmem:[%s2] sm:$0xf]
        %462 = vset.pattern.permute.xlu0 0
        %463 = vperm.xlu0 %462, %v460
        %v464 = vpop.permute.xlu0 %463
        %v466 = vunpack.c.l.s4 839922192
        %v467 = vunpack.c.0.s8 %v466
        %v468 = vlaneseq
        %v469 = vshrl.u32 %v468, 7
        %v470 = vsub.s32 %v467, %v469
        %v471 = vrot.slane %v464, %v470
        %v473 = vadd.f32 %v458, %v471
        %v474 = vadd.f32 %v459, %v471
        %v475 = vmax.f32 %v473, 0.0
        %v476 = vmax.f32 %v474, 0.0
        %v477 = vld [vmem:[#allocation7] sm:$0xff]
        %v478 = vld [vmem:[#allocation7 + $0x8] sm:$0xff]
        %v479 = vld [vmem:[#allocation7 + $0x10] sm:$0xff]
        %v480 = vld [vmem:[#allocation7 + $0x18] sm:$0xff]
        %v481 = vld [vmem:[#allocation7 + $0x20] sm:$0x1]
        %v482 = vld [vmem:[#allocation7 + $0x28] sm:$0x1]
        %v483 = vld [vmem:[#allocation7 + $0x30] sm:$0x1]
        %v484 = vld [vmem:[#allocation7 + $0x38] sm:$0x1]
        %v487 = vcombine.high %v475, %v475
        %v488 = vcombine.high %v476, %v476
        %489 = vrot.lane.b32.xlu0 %v475, 17
        %v490 = vpop.permute.xlu0 %489
        %491 = vrot.lane.b32.xlu0 %v487, 17
        %v492 = vpop.permute.xlu0 %491
        %493 = vrot.lane.b32.xlu0 %v476, 17
        %v494 = vpop.permute.xlu0 %493
        %495 = vrot.lane.b32.xlu0 %v488, 17
        %v496 = vpop.permute.xlu0 %495
        %vm497 = vcmask 138240
        %v498 = vsel %vm497, %v490, %v492
        %v499 = vsel %vm497, %v492, %v494
        %v500 = vsel %vm497, %v494, %v496
        %v506 = vsel %vm497, 0.0, %v490
        %v507 = vsel %vm497, %v496, 0.0
        %v508 = vlaneseq
        %v509 = vshrl.u32 %v508, 7
        %v510 = vsub.s32 0, %v509
        %v511 = vrot.slane %v477, %v510
        %v512 = vlaneseq
        %v513 = vshrl.u32 %v512, 7
        %v514 = vsub.s32 0, %v513
        %v515 = vrot.slane %v478, %v514
        %v516 = vlaneseq
        %v517 = vshrl.u32 %v516, 7
        %v518 = vsub.s32 0, %v517
        %v519 = vrot.slane %v479, %v518
        %v520 = vlaneseq
        %v521 = vshrl.u32 %v520, 7
        %v522 = vsub.s32 0, %v521
        %v523 = vrot.slane %v480, %v522
        %v524 = vmul.f32 %v506, %v511
        %v525 = vmul.f32 %v498, %v515
        %v526 = vmul.f32 %v499, %v519
        %v527 = vmul.f32 %v500, %v523
        %v528 = vlaneseq
        %v529 = vshrl.u32 %v528, 7
        %v530 = vsub.s32 1, %v529
        %v531 = vrot.slane %v477, %v530
        %v532 = vlaneseq
        %v533 = vshrl.u32 %v532, 7
        %v534 = vsub.s32 1, %v533
        %v535 = vrot.slane %v478, %v534
        %v536 = vlaneseq
        %v537 = vshrl.u32 %v536, 7
        %v538 = vsub.s32 1, %v537
        %v539 = vrot.slane %v479, %v538
        %v540 = vlaneseq
        %v541 = vshrl.u32 %v540, 7
        %v542 = vsub.s32 1, %v541
        %v543 = vrot.slane %v480, %v542
        %548 = vrot.lane.b32.xlu0 %v531, 1
        %v549 = vpop.permute.xlu0 %548
        %550 = vrot.lane.b32.xlu0 %v535, 1
        %v551 = vpop.permute.xlu0 %550
        %552 = vrot.lane.b32.xlu0 %v539, 1
        %v553 = vpop.permute.xlu0 %552
        %554 = vrot.lane.b32.xlu0 %v543, 1
        %v555 = vpop.permute.xlu0 %554
        %vm556 = vcmask 7168
        %v557 = vsel %vm556, %v549, %v551
        %v558 = vsel %vm556, %v551, %v553
        %v559 = vsel %vm556, %v553, %v555
        %v565 = vmul.f32 %v506, %v549
        %v566 = vmul.f32 %v498, %v557
        %v567 = vmul.f32 %v499, %v558
        %v568 = vmul.f32 %v500, %v559
        %v569 = vmul.f32 %v507, %v555
        %v570 = vlaneseq
        %v571 = vshrl.u32 %v570, 7
        %v572 = vsub.s32 2, %v571
        %v573 = vrot.slane %v477, %v572
        %v574 = vlaneseq
        %v575 = vshrl.u32 %v574, 7
        %v576 = vsub.s32 2, %v575
        %v577 = vrot.slane %v478, %v576
        %v578 = vlaneseq
        %v579 = vshrl.u32 %v578, 7
        %v580 = vsub.s32 2, %v579
        %v581 = vrot.slane %v479, %v580
        %v582 = vlaneseq
        %v583 = vshrl.u32 %v582, 7
        %v584 = vsub.s32 2, %v583
        %v585 = vrot.slane %v480, %v584
        %590 = vrot.lane.b32.xlu0 %v573, 2
        %v591 = vpop.permute.xlu0 %590
        %592 = vrot.lane.b32.xlu0 %v577, 2
        %v593 = vpop.permute.xlu0 %592
        %594 = vrot.lane.b32.xlu0 %v581, 2
        %v595 = vpop.permute.xlu0 %594
        %596 = vrot.lane.b32.xlu0 %v585, 2
        %v597 = vpop.permute.xlu0 %596
        %vm598 = vcmask 15360
        %v599 = vsel %vm598, %v591, %v593
        %v600 = vsel %vm598, %v593, %v595
        %v601 = vsel %vm598, %v595, %v597
        %v607 = vmul.f32 %v506, %v591
        %v608 = vmul.f32 %v498, %v599
        %v609 = vmul.f32 %v499, %v600
        %v610 = vmul.f32 %v500, %v601
        %v611 = vmul.f32 %v507, %v597
        %v612 = vlaneseq
        %v613 = vshrl.u32 %v612, 7
        %v614 = vsub.s32 3, %v613
        %v615 = vrot.slane %v477, %v614
        %v616 = vlaneseq
        %v617 = vshrl.u32 %v616, 7
        %v618 = vsub.s32 3, %v617
        %v619 = vrot.slane %v478, %v618
        %v620 = vlaneseq
        %v621 = vshrl.u32 %v620, 7
        %v622 = vsub.s32 3, %v621
        %v623 = vrot.slane %v479, %v622
        %v624 = vlaneseq
        %v625 = vshrl.u32 %v624, 7
        %v626 = vsub.s32 3, %v625
        %v627 = vrot.slane %v480, %v626
        %632 = vrot.lane.b32.xlu0 %v615, 16
        %v633 = vpop.permute.xlu0 %632
        %634 = vrot.lane.b32.xlu0 %v619, 16
        %v635 = vpop.permute.xlu0 %634
        %636 = vrot.lane.b32.xlu0 %v623, 16
        %v637 = vpop.permute.xlu0 %636
        %638 = vrot.lane.b32.xlu0 %v627, 16
        %v639 = vpop.permute.xlu0 %638
        %vm640 = vcmask 130048
        %v641 = vsel %vm640, %v633, %v635
        %v642 = vsel %vm640, %v635, %v637
        %v643 = vsel %vm640, %v637, %v639
        %v649 = vmul.f32 %v506, %v633
        %v650 = vmul.f32 %v498, %v641
        %v651 = vmul.f32 %v499, %v642
        %v652 = vmul.f32 %v500, %v643
        %v653 = vmul.f32 %v507, %v639
        %v654 = vlaneseq
        %v655 = vshrl.u32 %v654, 7
        %v656 = vsub.s32 4, %v655
        %v657 = vrot.slane %v477, %v656
        %v658 = vlaneseq
        %v659 = vshrl.u32 %v658, 7
        %v660 = vsub.s32 4, %v659
        %v661 = vrot.slane %v478, %v660
        %v662 = vlaneseq
        %v663 = vshrl.u32 %v662, 7
        %v664 = vsub.s32 4, %v663
        %v665 = vrot.slane %v479, %v664
        %v666 = vlaneseq
        %v667 = vshrl.u32 %v666, 7
        %v668 = vsub.s32 4, %v667
        %v669 = vrot.slane %v480, %v668
        %674 = vrot.lane.b32.xlu0 %v657, 17
        %v675 = vpop.permute.xlu0 %674
        %676 = vrot.lane.b32.xlu0 %v661, 17
        %v677 = vpop.permute.xlu0 %676
        %678 = vrot.lane.b32.xlu0 %v665, 17
        %v679 = vpop.permute.xlu0 %678
        %680 = vrot.lane.b32.xlu0 %v669, 17
        %v681 = vpop.permute.xlu0 %680
        %v682 = vsel %vm497, %v675, %v677
        %v683 = vsel %vm497, %v677, %v679
        %v684 = vsel %vm497, %v679, %v681
        %v690 = vmul.f32 %v506, %v675
        %v691 = vmul.f32 %v498, %v682
        %v692 = vmul.f32 %v499, %v683
        %v693 = vmul.f32 %v500, %v684
        %v694 = vmul.f32 %v507, %v681
        %v695 = vlaneseq
        %v696 = vshrl.u32 %v695, 7
        %v697 = vsub.s32 5, %v696
        %v698 = vrot.slane %v477, %v697
        %v699 = vlaneseq
        %v700 = vshrl.u32 %v699, 7
        %v701 = vsub.s32 5, %v700
        %v702 = vrot.slane %v478, %v701
        %v703 = vlaneseq
        %v704 = vshrl.u32 %v703, 7
        %v705 = vsub.s32 5, %v704
        %v706 = vrot.slane %v479, %v705
        %v707 = vlaneseq
        %v708 = vshrl.u32 %v707, 7
        %v709 = vsub.s32 5, %v708
        %v710 = vrot.slane %v480, %v709
        %715 = vrot.lane.b32.xlu0 %v698, 18
        %v716 = vpop.permute.xlu0 %715
        %717 = vrot.lane.b32.xlu0 %v702, 18
        %v718 = vpop.permute.xlu0 %717
        %719 = vrot.lane.b32.xlu0 %v706, 18
        %v720 = vpop.permute.xlu0 %719
        %721 = vrot.lane.b32.xlu0 %v710, 18
        %v722 = vpop.permute.xlu0 %721
        %vm723 = vcmask 146432
        %v724 = vsel %vm723, %v716, %v718
        %v725 = vsel %vm723, %v718, %v720
        %v726 = vsel %vm723, %v720, %v722
        %v732 = vmul.f32 %v506, %v716
        %v733 = vmul.f32 %v498, %v724
        %v734 = vmul.f32 %v499, %v725
        %v735 = vmul.f32 %v500, %v726
        %v736 = vmul.f32 %v507, %v722
        %v737 = vlaneseq
        %v738 = vshrl.u32 %v737, 7
        %v739 = vsub.s32 6, %v738
        %v740 = vrot.slane %v477, %v739
        %v741 = vlaneseq
        %v742 = vshrl.u32 %v741, 7
        %v743 = vsub.s32 6, %v742
        %v744 = vrot.slane %v478, %v743
        %v745 = vlaneseq
        %v746 = vshrl.u32 %v745, 7
        %v747 = vsub.s32 6, %v746
        %v748 = vrot.slane %v479, %v747
        %v749 = vlaneseq
        %v750 = vshrl.u32 %v749, 7
        %v751 = vsub.s32 6, %v750
        %v752 = vrot.slane %v480, %v751
        %757 = vrot.lane.b32.xlu0 %v740, 32
        %v758 = vpop.permute.xlu0 %757
        %759 = vrot.lane.b32.xlu0 %v744, 32
        %v760 = vpop.permute.xlu0 %759
        %761 = vrot.lane.b32.xlu0 %v748, 32
        %v762 = vpop.permute.xlu0 %761
        %763 = vrot.lane.b32.xlu0 %v752, 32
        %v764 = vpop.permute.xlu0 %763
        %vm765 = vcmask 261120
        %v766 = vsel %vm765, %v758, %v760
        %v767 = vsel %vm765, %v760, %v762
        %v768 = vsel %vm765, %v762, %v764
        %v774 = vmul.f32 %v506, %v758
        %v775 = vmul.f32 %v498, %v766
        %v776 = vmul.f32 %v499, %v767
        %v777 = vmul.f32 %v500, %v768
        %v778 = vmul.f32 %v507, %v764
        %v779 = vlaneseq
        %v780 = vshrl.u32 %v779, 7
        %v781 = vsub.s32 7, %v780
        %v782 = vrot.slane %v477, %v781
        %v783 = vlaneseq
        %v784 = vshrl.u32 %v783, 7
        %v785 = vsub.s32 7, %v784
        %v786 = vrot.slane %v478, %v785
        %v787 = vlaneseq
        %v788 = vshrl.u32 %v787, 7
        %v789 = vsub.s32 7, %v788
        %v790 = vrot.slane %v479, %v789
        %v791 = vlaneseq
        %v792 = vshrl.u32 %v791, 7
        %v793 = vsub.s32 7, %v792
        %v794 = vrot.slane %v480, %v793
        %799 = vrot.lane.b32.xlu0 %v782, 33
        %v800 = vpop.permute.xlu0 %799
        %801 = vrot.lane.b32.xlu0 %v786, 33
        %v802 = vpop.permute.xlu0 %801
        %803 = vrot.lane.b32.xlu0 %v790, 33
        %v804 = vpop.permute.xlu0 %803
        %805 = vrot.lane.b32.xlu0 %v794, 33
        %v806 = vpop.permute.xlu0 %805
        %vm807 = vcmask 269312
        %v808 = vsel %vm807, %v800, %v802
        %v809 = vsel %vm807, %v802, %v804
        %v810 = vsel %vm807, %v804, %v806
        %v816 = vmul.f32 %v506, %v800
        %v817 = vmul.f32 %v498, %v808
        %v818 = vmul.f32 %v499, %v809
        %v819 = vmul.f32 %v500, %v810
        %v820 = vmul.f32 %v507, %v806
        %v821 = vlaneseq
        %v822 = vshrl.u32 %v821, 7
        %v823 = vsub.s32 0, %v822
        %v824 = vrot.slane %v481, %v823
        %v825 = vlaneseq
        %v826 = vshrl.u32 %v825, 7
        %v827 = vsub.s32 0, %v826
        %v828 = vrot.slane %v482, %v827
        %v829 = vlaneseq
        %v830 = vshrl.u32 %v829, 7
        %v831 = vsub.s32 0, %v830
        %v832 = vrot.slane %v483, %v831
        %v833 = vlaneseq
        %v834 = vshrl.u32 %v833, 7
        %v835 = vsub.s32 0, %v834
        %v836 = vrot.slane %v484, %v835
        %841 = vrot.lane.b32.xlu0 %v824, 34
        %v842 = vpop.permute.xlu0 %841
        %843 = vrot.lane.b32.xlu0 %v828, 34
        %v844 = vpop.permute.xlu0 %843
        %845 = vrot.lane.b32.xlu0 %v832, 34
        %v846 = vpop.permute.xlu0 %845
        %847 = vrot.lane.b32.xlu0 %v836, 34
        %v848 = vpop.permute.xlu0 %847
        %vm849 = vcmask 277504
        %v850 = vsel %vm849, %v842, %v844
        %v851 = vsel %vm849, %v844, %v846
        %v852 = vsel %vm849, %v846, %v848
        %v858 = vmul.f32 %v506, %v842
        %v859 = vmul.f32 %v498, %v850
        %v860 = vmul.f32 %v499, %v851
        %v861 = vmul.f32 %v500, %v852
        %v862 = vmul.f32 %v507, %v848
        %v868 = vrot.slane %v565, 4
        %v869 = vrot.slane %v566, 4
        %v870 = vrot.slane %v567, 4
        %v871 = vrot.slane %v568, 4
        %v872 = vrot.slane %v569, 4
        %873 = vrot.lane.b32.xlu0 %v868, 127
        %v874 = vpop.permute.xlu0 %873
        %875 = vrot.lane.b32.xlu0 %v869, 127
        %v876 = vpop.permute.xlu0 %875
        %877 = vrot.lane.b32.xlu0 %v870, 127
        %v878 = vpop.permute.xlu0 %877
        %879 = vrot.lane.b32.xlu0 %v871, 127
        %v880 = vpop.permute.xlu0 %879
        %881 = vrot.lane.b32.xlu0 %v872, 127
        %v882 = vpop.permute.xlu0 %881
        %vm883 = vcmask 1039360
        %v884 = vsel %vm883, %v874, %v876
        %v885 = vsel %vm883, %v876, %v878
        %v886 = vsel %vm883, %v878, %v880
        %v887 = vsel %vm883, %v880, %v882
        %897 = vrot.lane.b32.xlu0 %v607, 126
        %v898 = vpop.permute.xlu0 %897
        %899 = vrot.lane.b32.xlu0 %v608, 126
        %v900 = vpop.permute.xlu0 %899
        %901 = vrot.lane.b32.xlu0 %v609, 126
        %v902 = vpop.permute.xlu0 %901
        %903 = vrot.lane.b32.xlu0 %v610, 126
        %v904 = vpop.permute.xlu0 %903
        %905 = vrot.lane.b32.xlu0 %v611, 126
        %v906 = vpop.permute.xlu0 %905
        %vm907 = vcmask 1031168
        %v908 = vsel %vm907, %v898, %v900
        %v909 = vsel %vm907, %v900, %v902
        %v910 = vsel %vm907, %v902, %v904
        %v911 = vsel %vm907, %v904, %v906
        %v921 = vrot.slane %v649, 4
        %v922 = vrot.slane %v650, 4
        %v923 = vrot.slane %v651, 4
        %v924 = vrot.slane %v652, 4
        %v925 = vrot.slane %v653, 4
        %926 = vrot.lane.b32.xlu0 %v921, 112
        %v927 = vpop.permute.xlu0 %926
        %928 = vrot.lane.b32.xlu0 %v922, 112
        %v929 = vpop.permute.xlu0 %928
        %930 = vrot.lane.b32.xlu0 %v923, 112
        %v931 = vpop.permute.xlu0 %930
        %932 = vrot.lane.b32.xlu0 %v924, 112
        %v933 = vpop.permute.xlu0 %932
        %934 = vrot.lane.b32.xlu0 %v925, 112
        %v935 = vpop.permute.xlu0 %934
        %vm936 = vcmask 916480
        %v937 = vsel %vm936, %v927, %v929
        %v938 = vsel %vm936, %v929, %v931
        %v939 = vsel %vm936, %v931, %v933
        %v940 = vsel %vm936, %v933, %v935
        %950 = vrot.lane.b32.xlu0 %v690, 111
        %v951 = vpop.permute.xlu0 %950
        %952 = vrot.lane.b32.xlu0 %v691, 111
        %v953 = vpop.permute.xlu0 %952
        %954 = vrot.lane.b32.xlu0 %v692, 111
        %v955 = vpop.permute.xlu0 %954
        %956 = vrot.lane.b32.xlu0 %v693, 111
        %v957 = vpop.permute.xlu0 %956
        %958 = vrot.lane.b32.xlu0 %v694, 111
        %v959 = vpop.permute.xlu0 %958
        %vm960 = vcmask 908288
        %v961 = vsel %vm960, %v951, %v953
        %v962 = vsel %vm960, %v953, %v955
        %v963 = vsel %vm960, %v955, %v957
        %v964 = vsel %vm960, %v957, %v959
        %v974 = vrot.slane %v732, 4
        %v975 = vrot.slane %v733, 4
        %v976 = vrot.slane %v734, 4
        %v977 = vrot.slane %v735, 4
        %v978 = vrot.slane %v736, 4
        %979 = vrot.lane.b32.xlu0 %v974, 110
        %v980 = vpop.permute.xlu0 %979
        %981 = vrot.lane.b32.xlu0 %v975, 110
        %v982 = vpop.permute.xlu0 %981
        %983 = vrot.lane.b32.xlu0 %v976, 110
        %v984 = vpop.permute.xlu0 %983
        %985 = vrot.lane.b32.xlu0 %v977, 110
        %v986 = vpop.permute.xlu0 %985
        %987 = vrot.lane.b32.xlu0 %v978, 110
        %v988 = vpop.permute.xlu0 %987
        %vm989 = vcmask 900096
        %v990 = vsel %vm989, %v980, %v982
        %v991 = vsel %vm989, %v982, %v984
        %v992 = vsel %vm989, %v984, %v986
        %v993 = vsel %vm989, %v986, %v988
        %1003 = vrot.lane.b32.xlu0 %v774, 96
        %v1004 = vpop.permute.xlu0 %1003
        %1005 = vrot.lane.b32.xlu0 %v775, 96
        %v1006 = vpop.permute.xlu0 %1005
        %1007 = vrot.lane.b32.xlu0 %v776, 96
        %v1008 = vpop.permute.xlu0 %1007
        %1009 = vrot.lane.b32.xlu0 %v777, 96
        %v1010 = vpop.permute.xlu0 %1009
        %1011 = vrot.lane.b32.xlu0 %v778, 96
        %v1012 = vpop.permute.xlu0 %1011
        %vm1013 = vcmask 785408
        %v1014 = vsel %vm1013, %v1004, %v1006
        %v1015 = vsel %vm1013, %v1006, %v1008
        %v1016 = vsel %vm1013, %v1008, %v1010
        %v1017 = vsel %vm1013, %v1010, %v1012
        %v1027 = vrot.slane %v816, 4
        %v1028 = vrot.slane %v817, 4
        %v1029 = vrot.slane %v818, 4
        %v1030 = vrot.slane %v819, 4
        %v1031 = vrot.slane %v820, 4
        %1032 = vrot.lane.b32.xlu0 %v1027, 95
        %v1033 = vpop.permute.xlu0 %1032
        %1034 = vrot.lane.b32.xlu0 %v1028, 95
        %v1035 = vpop.permute.xlu0 %1034
        %1036 = vrot.lane.b32.xlu0 %v1029, 95
        %v1037 = vpop.permute.xlu0 %1036
        %1038 = vrot.lane.b32.xlu0 %v1030, 95
        %v1039 = vpop.permute.xlu0 %1038
        %1040 = vrot.lane.b32.xlu0 %v1031, 95
        %v1041 = vpop.permute.xlu0 %1040
        %vm1042 = vcmask 777216
        %v1043 = vsel %vm1042, %v1033, %v1035
        %v1044 = vsel %vm1042, %v1035, %v1037
        %v1045 = vsel %vm1042, %v1037, %v1039
        %v1046 = vsel %vm1042, %v1039, %v1041
        %1056 = vrot.lane.b32.xlu0 %v858, 94
        %v1057 = vpop.permute.xlu0 %1056
        %1058 = vrot.lane.b32.xlu0 %v859, 94
        %v1059 = vpop.permute.xlu0 %1058
        %1060 = vrot.lane.b32.xlu0 %v860, 94
        %v1061 = vpop.permute.xlu0 %1060
        %1062 = vrot.lane.b32.xlu0 %v861, 94
        %v1063 = vpop.permute.xlu0 %1062
        %1064 = vrot.lane.b32.xlu0 %v862, 94
        %v1065 = vpop.permute.xlu0 %1064
        %vm1066 = vcmask 769024
        %v1067 = vsel %vm1066, %v1057, %v1059
        %v1068 = vsel %vm1066, %v1059, %v1061
        %v1069 = vsel %vm1066, %v1061, %v1063
        %v1070 = vsel %vm1066, %v1063, %v1065
        %vm1075 = vcmask 1043456
        %v1076 = vsel %vm1075, %v524, %v884
        %v1077 = vsel %vm1075, %v525, %v885
        %v1078 = vsel %vm1075, %v526, %v886
        %v1079 = vsel %vm1075, %v527, %v887
        %v1080 = vsel %vm1075, %v908, %v937
        %v1081 = vsel %vm1075, %v909, %v938
        %v1082 = vsel %vm1075, %v910, %v939
        %v1083 = vsel %vm1075, %v911, %v940
        %v1084 = vsel %vm1075, %v961, %v990
        %v1085 = vsel %vm1075, %v962, %v991
        %v1086 = vsel %vm1075, %v963, %v992
        %v1087 = vsel %vm1075, %v964, %v993
        %v1088 = vsel %vm1075, %v1014, %v1043
        %v1089 = vsel %vm1075, %v1015, %v1044
        %v1090 = vsel %vm1075, %v1016, %v1045
        %v1091 = vsel %vm1075, %v1017, %v1046
        %v1092 = vpack.c.bf16 %v1080, %v1076
        %v1093 = vpack.c.bf16 %v1081, %v1077
        %v1094 = vpack.c.bf16 %v1082, %v1078
        %v1095 = vpack.c.bf16 %v1083, %v1079
        %v1096 = vpack.c.bf16 %v1088, %v1084
        %v1097 = vpack.c.bf16 %v1089, %v1085
        %v1098 = vpack.c.bf16 %v1090, %v1086
        %v1099 = vpack.c.bf16 %v1091, %v1087
        %v1100 = vpack.c.bf16 %v1067, %v1067
        %v1101 = vpack.c.bf16 %v1068, %v1068
        %v1102 = vpack.c.bf16 %v1069, %v1069
        %v1103 = vpack.c.bf16 %v1070, %v1070
        %v1104 = vld [vmem:[#allocation2] sm:$0xf]
        %vm1105 = vcmask 293888
        %v1107 = vsel %vm1105, %v1104, 0
        %vm1109 = vcmask 1041408
        %v1111 = vsel %vm1109, %v1100, 0
        %v1114 = vsel %vm1109, %v1101, 0
        %v1117 = vsel %vm1109, %v1102, 0
        %v1120 = vsel %vm1109, %v1103, 0
        %1122 = vmatprep.subr.bf16.mxu0 0
        %1123 = vmatpush1.bf16.msra.mxu0 0
        %1124 = vmatprep.subr.bf16.mxu0 0
        %1125 = vmatpush1.bf16.msra.mxu0 0
        %1126 = vmatprep.subr.bf16.mxu0 0
        %1127 = vmatpush1.bf16.msra.mxu0 0
        %1128 = vmatprep.subr.bf16.mxu0 0
        %1129 = vmatpush1.bf16.msra.mxu0 0
        %1130 = vmatprep.subr.bf16.mxu0 0
        %1131 = vmatpush1.bf16.msra.mxu0 0
        %1132 = vmatprep.subr.bf16.mxu0 %v1114
        %1133 = vmatpush1.bf16.msra.mxu0 %v1111
        %1134 = vmatprep.subr.bf16.mxu0 %v1097
        %1135 = vmatpush1.bf16.msra.mxu0 %v1096
        %1136 = vmatprep.subr.bf16.mxu0 %v1093
        %1137 = vmatpush1.bf16.msra.mxu0 %v1092
        %1138 = vmatprep.subr.bf16.mxu0 0
        %1139 = vmatpush2.bf16.msra.mxu0 0
        %1140 = vmatprep.subr.bf16.mxu0 0
        %1141 = vmatpush2.bf16.msra.mxu0 0
        %1142 = vmatprep.subr.bf16.mxu0 0
        %1143 = vmatpush2.bf16.msra.mxu0 0
        %1144 = vmatprep.subr.bf16.mxu0 0
        %1145 = vmatpush2.bf16.msra.mxu0 0
        %1146 = vmatprep.subr.bf16.mxu0 0
        %1147 = vmatpush2.bf16.msra.mxu0 0
        %1148 = vmatprep.subr.bf16.mxu0 0
        %1149 = vmatpush2.bf16.msra.mxu0 0
        %1150 = vmatprep.subr.bf16.mxu0 0
        %1151 = vmatpush2.bf16.msra.mxu0 0
        %1152 = vmatprep.subr.bf16.mxu0 0
        %1153 = vmatpush2.bf16.msra.mxu0 0
        %1154 = vmatprep.mubr.bf16.mxu0 0
        %1155 = vmatmul.mubr.bf16.gmra.mxu0 %v1107
        %v1156 = vpop.f32.mrf.mxu0
        %v1157 = vadd.f32 0.0, %v1156
        %v1158 = vpop.f32.mrf.mxu0
        %v1159 = vadd.f32 0.0, %v1158
        %v1160 = vpop.f32.mrf.mxu0
        %v1161 = vpop.f32.mrf.mxu0
        %1162 = vdwg.mxu0
        %1163 = vmatprep.subr.bf16.mxu0 0
        %1164 = vmatpush1.bf16.msra.mxu0 0
        %1165 = vmatprep.subr.bf16.mxu0 0
        %1166 = vmatpush1.bf16.msra.mxu0 0
        %1167 = vmatprep.subr.bf16.mxu0 0
        %1168 = vmatpush1.bf16.msra.mxu0 0
        %1169 = vmatprep.subr.bf16.mxu0 0
        %1170 = vmatpush1.bf16.msra.mxu0 0
        %1171 = vmatprep.subr.bf16.mxu0 0
        %1172 = vmatpush1.bf16.msra.mxu0 0
        %1173 = vmatprep.subr.bf16.mxu0 %v1120
        %1174 = vmatpush1.bf16.msra.mxu0 %v1117
        %1175 = vmatprep.subr.bf16.mxu0 %v1099
        %1176 = vmatpush1.bf16.msra.mxu0 %v1098
        %1177 = vmatprep.subr.bf16.mxu0 %v1095
        %1178 = vmatpush1.bf16.msra.mxu0 %v1094
        %1179 = vmatprep.subr.bf16.mxu0 0
        %1180 = vmatpush2.bf16.msra.mxu0 0
        %1181 = vmatprep.subr.bf16.mxu0 0
        %1182 = vmatpush2.bf16.msra.mxu0 0
        %1183 = vmatprep.subr.bf16.mxu0 0
        %1184 = vmatpush2.bf16.msra.mxu0 0
        %1185 = vmatprep.subr.bf16.mxu0 0
        %1186 = vmatpush2.bf16.msra.mxu0 0
        %1187 = vmatprep.subr.bf16.mxu0 0
        %1188 = vmatpush2.bf16.msra.mxu0 0
        %1189 = vmatprep.subr.bf16.mxu0 0
        %1190 = vmatpush2.bf16.msra.mxu0 0
        %1191 = vmatprep.subr.bf16.mxu0 0
        %1192 = vmatpush2.bf16.msra.mxu0 0
        %1193 = vmatprep.subr.bf16.mxu0 0
        %1194 = vmatpush2.bf16.msra.mxu0 0
        %1195 = vmatprep.mubr.bf16.mxu0 0
        %1196 = vmatmul.mubr.bf16.gmra.mxu0 %v1107
        %v1197 = vpop.f32.mrf.mxu0
        %v1198 = vadd.f32 0.0, %v1197
        %v1199 = vpop.f32.mrf.mxu0
        %v1200 = vadd.f32 0.0, %v1199
        %v1201 = vpop.f32.mrf.mxu0
        %v1202 = vpop.f32.mrf.mxu0
        %1203 = vdwg.mxu0
        %v1204 = vld [vmem:[#allocation8] sm:$0xf]
        %v1205 = vld [vmem:[#allocation8 + $0x4] sm:$0xf]
        %v1206 = vld [vmem:[#allocation8 + $0x8] sm:$0xf]
        %v1207 = vld [vmem:[#allocation8 + $0xc] sm:$0xf]
        %v1208 = vld [vmem:[#allocation8 + $0x10] sm:$0xf]
        %v1209 = vld [vmem:[#allocation8 + $0x14] sm:$0xf]
        %v1210 = vld [vmem:[#allocation8 + $0x18] sm:$0xf]
        %v1211 = vld [vmem:[#allocation8 + $0x1c] sm:$0xf]
        %v1212 = vld [vmem:[#allocation8 + $0x20] sm:$0xf]
        %v1213 = vld [vmem:[#allocation8 + $0x24] sm:$0xf]
        %v1214 = vld [vmem:[#allocation8 + $0x28] sm:$0xf]
        %v1215 = vld [vmem:[#allocation8 + $0x2c] sm:$0xf]
        %v1216 = vld [vmem:[#allocation8 + $0x30] sm:$0xf]
        %v1217 = vld [vmem:[#allocation8 + $0x34] sm:$0xf]
        %v1218 = vld [vmem:[#allocation8 + $0x38] sm:$0xf]
        %v1219 = vld [vmem:[#allocation8 + $0x3c] sm:$0xf]
        %v1220 = vld [vmem:[#allocation8 + $0x40] sm:$0xf]
        %v1221 = vld [vmem:[#allocation8 + $0x44] sm:$0xf]
        %v1222 = vld [vmem:[#allocation8 + $0x48] sm:$0xf]
        %v1223 = vld [vmem:[#allocation8 + $0x4c] sm:$0xf]
        %v1224 = vld [vmem:[#allocation8 + $0x50] sm:$0xf]
        %v1225 = vld [vmem:[#allocation8 + $0x54] sm:$0xf]
        %v1226 = vld [vmem:[#allocation8 + $0x58] sm:$0xf]
        %v1227 = vld [vmem:[#allocation8 + $0x5c] sm:$0xf]
        %v1228 = vld [vmem:[#allocation8 + $0x60] sm:$0xf]
        %v1229 = vld [vmem:[#allocation8 + $0x64] sm:$0xf]
        %v1230 = vld [vmem:[#allocation8 + $0x68] sm:$0xf]
        %v1231 = vld [vmem:[#allocation8 + $0x6c] sm:$0xf]
        %v1232 = vld [vmem:[#allocation8 + $0x70] sm:$0xf]
        %v1233 = vld [vmem:[#allocation8 + $0x74] sm:$0xf]
        %v1234 = vld [vmem:[#allocation8 + $0x78] sm:$0xf]
        %v1235 = vld [vmem:[#allocation8 + $0x7c] sm:$0xf]
        %v1236 = vld [vmem:[#allocation8 + $0x80] sm:$0xf]
        %v1237 = vld [vmem:[#allocation8 + $0x84] sm:$0xf]
        %v1238 = vld [vmem:[#allocation8 + $0x88] sm:$0xf]
        %v1239 = vld [vmem:[#allocation8 + $0x8c] sm:$0xf]
        %v1240 = vld [vmem:[#allocation8 + $0x90] sm:$0xf]
        %v1241 = vld [vmem:[#allocation8 + $0x94] sm:$0xf]
        %v1242 = vld [vmem:[#allocation8 + $0x98] sm:$0xf]
        %v1243 = vld [vmem:[#allocation8 + $0x9c] sm:$0xf]
        %v1244 = vld [vmem:[#allocation8 + $0xa0] sm:$0xf]
        %v1245 = vld [vmem:[#allocation8 + $0xa4] sm:$0xf]
        %v1246 = vld [vmem:[#allocation8 + $0xa8] sm:$0xf]
        %v1247 = vld [vmem:[#allocation8 + $0xac] sm:$0xf]
        %v1248 = vld [vmem:[#allocation8 + $0xb0] sm:$0xf]
        %v1249 = vld [vmem:[#allocation8 + $0xb4] sm:$0xf]
        %v1250 = vld [vmem:[#allocation8 + $0xb8] sm:$0xf]
        %v1251 = vld [vmem:[#allocation8 + $0xbc] sm:$0xf]
        %v1252 = vld [vmem:[#allocation8 + $0xc0] sm:$0xf]
        %v1253 = vld [vmem:[#allocation8 + $0xc4] sm:$0xf]
        %v1254 = vld [vmem:[#allocation8 + $0xc8] sm:$0xf]
        %v1255 = vld [vmem:[#allocation8 + $0xcc] sm:$0xf]
        %v1256 = vld [vmem:[#allocation8 + $0xd0] sm:$0xf]
        %v1257 = vld [vmem:[#allocation8 + $0xd4] sm:$0xf]
        %v1258 = vld [vmem:[#allocation8 + $0xd8] sm:$0xf]
        %v1259 = vld [vmem:[#allocation8 + $0xdc] sm:$0xf]
        %v1260 = vld [vmem:[#allocation8 + $0xe0] sm:$0xf]
        %v1261 = vld [vmem:[#allocation8 + $0xe4] sm:$0xf]
        %v1262 = vld [vmem:[#allocation8 + $0xe8] sm:$0xf]
        %v1263 = vld [vmem:[#allocation8 + $0xec] sm:$0xf]
        %v1264 = vld [vmem:[#allocation8 + $0xf0] sm:$0xf]
        %v1265 = vld [vmem:[#allocation8 + $0xf4] sm:$0xf]
        %v1266 = vld [vmem:[#allocation8 + $0xf8] sm:$0xf]
        %v1267 = vld [vmem:[#allocation8 + $0xfc] sm:$0xf]
        %v1268 = vpack.c.bf16 %v1157, %v1157
        %v1269 = vpack.c.bf16 %v1159, %v1159
        %v1270 = vpack.c.bf16 %v1198, %v1198
        %v1271 = vpack.c.bf16 %v1200, %v1200
        %v1336 = vunpack.c.l.b16 %v1204
        %v1337 = vunpack.c.l.b16 %v1205
        %v1338 = vunpack.c.l.b16 %v1206
        %v1339 = vunpack.c.l.b16 %v1207
        %v1340 = vunpack.c.l.b16 %v1208
        %v1341 = vunpack.c.l.b16 %v1209
        %v1342 = vunpack.c.l.b16 %v1210
        %v1343 = vunpack.c.l.b16 %v1211
        %v1344 = vunpack.c.l.b16 %v1212
        %v1345 = vunpack.c.l.b16 %v1213
        %v1346 = vunpack.c.l.b16 %v1214
        %v1347 = vunpack.c.l.b16 %v1215
        %v1348 = vunpack.c.l.b16 %v1216
        %v1349 = vunpack.c.l.b16 %v1217
        %v1350 = vunpack.c.l.b16 %v1218
        %v1351 = vunpack.c.l.b16 %v1219
        %v1352 = vunpack.c.l.b16 %v1220
        %v1353 = vunpack.c.l.b16 %v1221
        %v1354 = vunpack.c.l.b16 %v1222
        %v1355 = vunpack.c.l.b16 %v1223
        %v1356 = vunpack.c.l.b16 %v1224
        %v1357 = vunpack.c.l.b16 %v1225
        %v1358 = vunpack.c.l.b16 %v1226
        %v1359 = vunpack.c.l.b16 %v1227
        %v1360 = vunpack.c.l.b16 %v1228
        %v1361 = vunpack.c.l.b16 %v1229
        %v1362 = vunpack.c.l.b16 %v1230
        %v1363 = vunpack.c.l.b16 %v1231
        %v1364 = vunpack.c.l.b16 %v1232
        %v1365 = vunpack.c.l.b16 %v1233
        %v1366 = vunpack.c.l.b16 %v1234
        %v1367 = vunpack.c.l.b16 %v1235
        %v1368 = vunpack.c.l.b16 %v1236
        %v1369 = vunpack.c.l.b16 %v1237
        %v1370 = vunpack.c.l.b16 %v1238
        %v1371 = vunpack.c.l.b16 %v1239
        %v1372 = vunpack.c.l.b16 %v1240
        %v1373 = vunpack.c.l.b16 %v1241
        %v1374 = vunpack.c.l.b16 %v1242
        %v1375 = vunpack.c.l.b16 %v1243
        %v1376 = vunpack.c.l.b16 %v1244
        %v1377 = vunpack.c.l.b16 %v1245
        %v1378 = vunpack.c.l.b16 %v1246
        %v1379 = vunpack.c.l.b16 %v1247
        %v1380 = vunpack.c.l.b16 %v1248
        %v1381 = vunpack.c.l.b16 %v1249
        %v1382 = vunpack.c.l.b16 %v1250
        %v1383 = vunpack.c.l.b16 %v1251
        %v1384 = vunpack.c.l.b16 %v1252
        %v1385 = vunpack.c.l.b16 %v1253
        %v1386 = vunpack.c.l.b16 %v1254
        %v1387 = vunpack.c.l.b16 %v1255
        %v1388 = vunpack.c.l.b16 %v1256
        %v1389 = vunpack.c.l.b16 %v1257
        %v1390 = vunpack.c.l.b16 %v1258
        %v1391 = vunpack.c.l.b16 %v1259
        %v1392 = vunpack.c.l.b16 %v1260
        %v1393 = vunpack.c.l.b16 %v1261
        %v1394 = vunpack.c.l.b16 %v1262
        %v1395 = vunpack.c.l.b16 %v1263
        %v1396 = vunpack.c.l.b16 %v1264
        %v1397 = vunpack.c.l.b16 %v1265
        %v1398 = vunpack.c.l.b16 %v1266
        %v1399 = vunpack.c.l.b16 %v1267
        %v1400 = vpack.c.b16 %v1337, %v1336
        %v1401 = vpack.c.b16 %v1339, %v1338
        %v1402 = vpack.c.b16 %v1341, %v1340
        %v1403 = vpack.c.b16 %v1343, %v1342
        %v1404 = vpack.c.b16 %v1345, %v1344
        %v1405 = vpack.c.b16 %v1347, %v1346
        %v1406 = vpack.c.b16 %v1349, %v1348
        %v1407 = vpack.c.b16 %v1351, %v1350
        %v1408 = vpack.c.b16 %v1353, %v1352
        %v1409 = vpack.c.b16 %v1355, %v1354
        %v1410 = vpack.c.b16 %v1357, %v1356
        %v1411 = vpack.c.b16 %v1359, %v1358
        %v1412 = vpack.c.b16 %v1361, %v1360
        %v1413 = vpack.c.b16 %v1363, %v1362
        %v1414 = vpack.c.b16 %v1365, %v1364
        %v1415 = vpack.c.b16 %v1367, %v1366
        %v1416 = vpack.c.b16 %v1369, %v1368
        %v1417 = vpack.c.b16 %v1371, %v1370
        %v1418 = vpack.c.b16 %v1373, %v1372
        %v1419 = vpack.c.b16 %v1375, %v1374
        %v1420 = vpack.c.b16 %v1377, %v1376
        %v1421 = vpack.c.b16 %v1379, %v1378
        %v1422 = vpack.c.b16 %v1381, %v1380
        %v1423 = vpack.c.b16 %v1383, %v1382
        %v1424 = vpack.c.b16 %v1385, %v1384
        %v1425 = vpack.c.b16 %v1387, %v1386
        %v1426 = vpack.c.b16 %v1389, %v1388
        %v1427 = vpack.c.b16 %v1391, %v1390
        %v1428 = vpack.c.b16 %v1393, %v1392
        %v1429 = vpack.c.b16 %v1395, %v1394
        %v1430 = vpack.c.b16 %v1397, %v1396
        %v1431 = vpack.c.b16 %v1399, %v1398
        %1464 = vmatprep.subr.bf16.mxu0 0
        %1465 = vmatpush1.bf16.msra.mxu0 %v1407
        %1466 = vmatprep.subr.bf16.mxu0 0
        %1467 = vmatpush1.bf16.msra.mxu0 %v1406
        %1468 = vmatprep.subr.bf16.mxu0 0
        %1469 = vmatpush1.bf16.msra.mxu0 %v1405
        %1470 = vmatprep.subr.bf16.mxu0 0
        %1471 = vmatpush1.bf16.msra.mxu0 %v1404
        %1472 = vmatprep.subr.bf16.mxu0 0
        %1473 = vmatpush1.bf16.msra.mxu0 %v1403
        %1474 = vmatprep.subr.bf16.mxu0 0
        %1475 = vmatpush1.bf16.msra.mxu0 %v1402
        %1476 = vmatprep.subr.bf16.mxu0 0
        %1477 = vmatpush1.bf16.msra.mxu0 %v1401
        %1478 = vmatprep.subr.bf16.mxu0 0
        %1479 = vmatpush1.bf16.msra.mxu0 %v1400
        %1480 = vmatprep.subr.bf16.mxu0 0
        %1481 = vmatpush2.bf16.msra.mxu0 %v1415
        %1482 = vmatprep.subr.bf16.mxu0 0
        %1483 = vmatpush2.bf16.msra.mxu0 %v1414
        %1484 = vmatprep.subr.bf16.mxu0 0
        %1485 = vmatpush2.bf16.msra.mxu0 %v1413
        %1486 = vmatprep.subr.bf16.mxu0 0
        %1487 = vmatpush2.bf16.msra.mxu0 %v1412
        %1488 = vmatprep.subr.bf16.mxu0 0
        %1489 = vmatpush2.bf16.msra.mxu0 %v1411
        %1490 = vmatprep.subr.bf16.mxu0 0
        %1491 = vmatpush2.bf16.msra.mxu0 %v1410
        %1492 = vmatprep.subr.bf16.mxu0 0
        %1493 = vmatpush2.bf16.msra.mxu0 %v1409
        %1494 = vmatprep.subr.bf16.mxu0 0
        %1495 = vmatpush2.bf16.msra.mxu0 %v1408
        %1496 = vmatprep.mubr.bf16.mxu0 %v1269
        %1497 = vmatmul.mubr.bf16.gmra.mxu0 %v1268
        %v1498 = vpop.f32.mrf.mxu0
        %v1499 = vadd.f32 0.0, %v1498
        %v1500 = vpop.f32.mrf.mxu0
        %v1501 = vpop.f32.mrf.mxu0
        %v1502 = vpop.f32.mrf.mxu0
        %1503 = vdwg.mxu0
        %1504 = vmatprep.subr.bf16.mxu0 0
        %1505 = vmatpush1.bf16.msra.mxu0 %v1423
        %1506 = vmatprep.subr.bf16.mxu0 0
        %1507 = vmatpush1.bf16.msra.mxu0 %v1422
        %1508 = vmatprep.subr.bf16.mxu0 0
        %1509 = vmatpush1.bf16.msra.mxu0 %v1421
        %1510 = vmatprep.subr.bf16.mxu0 0
        %1511 = vmatpush1.bf16.msra.mxu0 %v1420
        %1512 = vmatprep.subr.bf16.mxu0 0
        %1513 = vmatpush1.bf16.msra.mxu0 %v1419
        %1514 = vmatprep.subr.bf16.mxu0 0
        %1515 = vmatpush1.bf16.msra.mxu0 %v1418
        %1516 = vmatprep.subr.bf16.mxu0 0
        %1517 = vmatpush1.bf16.msra.mxu0 %v1417
        %1518 = vmatprep.subr.bf16.mxu0 0
        %1519 = vmatpush1.bf16.msra.mxu0 %v1416
        %1520 = vmatprep.subr.bf16.mxu0 0
        %1521 = vmatpush2.bf16.msra.mxu0 %v1431
        %1522 = vmatprep.subr.bf16.mxu0 0
        %1523 = vmatpush2.bf16.msra.mxu0 %v1430
        %1524 = vmatprep.subr.bf16.mxu0 0
        %1525 = vmatpush2.bf16.msra.mxu0 %v1429
        %1526 = vmatprep.subr.bf16.mxu0 0
        %1527 = vmatpush2.bf16.msra.mxu0 %v1428
        %1528 = vmatprep.subr.bf16.mxu0 0
        %1529 = vmatpush2.bf16.msra.mxu0 %v1427
        %1530 = vmatprep.subr.bf16.mxu0 0
        %1531 = vmatpush2.bf16.msra.mxu0 %v1426
        %1532 = vmatprep.subr.bf16.mxu0 0
        %1533 = vmatpush2.bf16.msra.mxu0 %v1425
        %1534 = vmatprep.subr.bf16.mxu0 0
        %1535 = vmatpush2.bf16.msra.mxu0 %v1424
        %1536 = vmatprep.mubr.bf16.mxu0 %v1271
        %1537 = vmatmul.mubr.bf16.gmra.mxu0 %v1270
        %v1538 = vpop.f32.mrf.mxu0
        %v1539 = vadd.f32 %v1499, %v1538
        %v1540 = vpop.f32.mrf.mxu0
        %v1541 = vpop.f32.mrf.mxu0
        %v1542 = vpop.f32.mrf.mxu0
        %1543 = vdwg.mxu0
        %v1546 = vpack.c.bf16 %v475, %v475
        %v1547 = vpack.c.bf16 %v487, %v487
        %v1548 = vpack.c.bf16 %v476, %v476
        %v1549 = vpack.c.bf16 %v488, %v488
        %1550 = vmatprep.subr.bf16.mxu0 0
        %1551 = vmatpush1.bf16.msra.mxu0 %v1407
        %1552 = vmatprep.subr.bf16.mxu0 0
        %1553 = vmatpush1.bf16.msra.mxu0 %v1406
        %1554 = vmatprep.subr.bf16.mxu0 0
        %1555 = vmatpush1.bf16.msra.mxu0 %v1405
        %1556 = vmatprep.subr.bf16.mxu0 0
        %1557 = vmatpush1.bf16.msra.mxu0 %v1404
        %1558 = vmatprep.subr.bf16.mxu0 0
        %1559 = vmatpush1.bf16.msra.mxu0 %v1403
        %1560 = vmatprep.subr.bf16.mxu0 0
        %1561 = vmatpush1.bf16.msra.mxu0 %v1402
        %1562 = vmatprep.subr.bf16.mxu0 0
        %1563 = vmatpush1.bf16.msra.mxu0 %v1401
        %1564 = vmatprep.subr.bf16.mxu0 0
        %1565 = vmatpush1.bf16.msra.mxu0 %v1400
        %1566 = vmatprep.subr.bf16.mxu0 0
        %1567 = vmatpush2.bf16.msra.mxu0 %v1415
        %1568 = vmatprep.subr.bf16.mxu0 0
        %1569 = vmatpush2.bf16.msra.mxu0 %v1414
        %1570 = vmatprep.subr.bf16.mxu0 0
        %1571 = vmatpush2.bf16.msra.mxu0 %v1413
        %1572 = vmatprep.subr.bf16.mxu0 0
        %1573 = vmatpush2.bf16.msra.mxu0 %v1412
        %1574 = vmatprep.subr.bf16.mxu0 0
        %1575 = vmatpush2.bf16.msra.mxu0 %v1411
        %1576 = vmatprep.subr.bf16.mxu0 0
        %1577 = vmatpush2.bf16.msra.mxu0 %v1410
        %1578 = vmatprep.subr.bf16.mxu0 0
        %1579 = vmatpush2.bf16.msra.mxu0 %v1409
        %1580 = vmatprep.subr.bf16.mxu0 0
        %1581 = vmatpush2.bf16.msra.mxu0 %v1408
        %1582 = vmatprep.mubr.bf16.mxu0 %v1547
        %1583 = vmatmul.mubr.bf16.gmra.mxu0 %v1546
        %v1584 = vpop.f32.mrf.mxu0
        %v1585 = vadd.f32 0.0, %v1584
        %v1586 = vpop.f32.mrf.mxu0
        %v1587 = vpop.f32.mrf.mxu0
        %v1588 = vpop.f32.mrf.mxu0
        %1589 = vdwg.mxu0
        %1590 = vmatprep.subr.bf16.mxu0 0
        %1591 = vmatpush1.bf16.msra.mxu0 %v1423
        %1592 = vmatprep.subr.bf16.mxu0 0
        %1593 = vmatpush1.bf16.msra.mxu0 %v1422
        %1594 = vmatprep.subr.bf16.mxu0 0
        %1595 = vmatpush1.bf16.msra.mxu0 %v1421
        %1596 = vmatprep.subr.bf16.mxu0 0
        %1597 = vmatpush1.bf16.msra.mxu0 %v1420
        %1598 = vmatprep.subr.bf16.mxu0 0
        %1599 = vmatpush1.bf16.msra.mxu0 %v1419
        %1600 = vmatprep.subr.bf16.mxu0 0
        %1601 = vmatpush1.bf16.msra.mxu0 %v1418
        %1602 = vmatprep.subr.bf16.mxu0 0
        %1603 = vmatpush1.bf16.msra.mxu0 %v1417
        %1604 = vmatprep.subr.bf16.mxu0 0
        %1605 = vmatpush1.bf16.msra.mxu0 %v1416
        %1606 = vmatprep.subr.bf16.mxu0 0
        %1607 = vmatpush2.bf16.msra.mxu0 %v1431
        %1608 = vmatprep.subr.bf16.mxu0 0
        %1609 = vmatpush2.bf16.msra.mxu0 %v1430
        %1610 = vmatprep.subr.bf16.mxu0 0
        %1611 = vmatpush2.bf16.msra.mxu0 %v1429
        %1612 = vmatprep.subr.bf16.mxu0 0
        %1613 = vmatpush2.bf16.msra.mxu0 %v1428
        %1614 = vmatprep.subr.bf16.mxu0 0
        %1615 = vmatpush2.bf16.msra.mxu0 %v1427
        %1616 = vmatprep.subr.bf16.mxu0 0
        %1617 = vmatpush2.bf16.msra.mxu0 %v1426
        %1618 = vmatprep.subr.bf16.mxu0 0
        %1619 = vmatpush2.bf16.msra.mxu0 %v1425
        %1620 = vmatprep.subr.bf16.mxu0 0
        %1621 = vmatpush2.bf16.msra.mxu0 %v1424
        %1622 = vmatprep.mubr.bf16.mxu0 %v1549
        %1623 = vmatmul.mubr.bf16.gmra.mxu0 %v1548
        %v1624 = vpop.f32.mrf.mxu0
        %v1625 = vadd.f32 %v1585, %v1624
        %v1626 = vpop.f32.mrf.mxu0
        %v1627 = vpop.f32.mrf.mxu0
        %v1628 = vpop.f32.mrf.mxu0
        %1629 = vdwg.mxu0
        %v1630 = vld [vmem:[%s10] sm:$0xf]
        %v1631 = vpack.c.bf16 %v1625, %v1625
        %vm1632 = vcmask 31744
        %v1634 = vsel %vm1632, %v1630, 0
        %v1637 = vsel %vm1109, %v1631, 0
        %1639 = vmatprep.subr.bf16.mxu0 0
        %1640 = vmatpush1.bf16.msra.mxu0 0
        %1641 = vmatprep.subr.bf16.mxu0 0
        %1642 = vmatpush1.bf16.msra.mxu0 0
        %1643 = vmatprep.subr.bf16.mxu0 0
        %1644 = vmatpush1.bf16.msra.mxu0 0
        %1645 = vmatprep.subr.bf16.mxu0 0
        %1646 = vmatpush1.bf16.msra.mxu0 0
        %1647 = vmatprep.subr.bf16.mxu0 0
        %1648 = vmatpush1.bf16.msra.mxu0 0
        %1649 = vmatprep.subr.bf16.mxu0 0
        %1650 = vmatpush1.bf16.msra.mxu0 0
        %1651 = vmatprep.subr.bf16.mxu0 0
        %1652 = vmatpush1.bf16.msra.mxu0 0
        %1653 = vmatprep.subr.bf16.mxu0 0
        %1654 = vmatpush1.bf16.msra.mxu0 %v1637
        %1655 = vmatprep.subr.bf16.mxu0 0
        %1656 = vmatpush2.bf16.msra.mxu0 0
        %1657 = vmatprep.subr.bf16.mxu0 0
        %1658 = vmatpush2.bf16.msra.mxu0 0
        %1659 = vmatprep.subr.bf16.mxu0 0
        %1660 = vmatpush2.bf16.msra.mxu0 0
        %1661 = vmatprep.subr.bf16.mxu0 0
        %1662 = vmatpush2.bf16.msra.mxu0 0
        %1663 = vmatprep.subr.bf16.mxu0 0
        %1664 = vmatpush2.bf16.msra.mxu0 0
        %1665 = vmatprep.subr.bf16.mxu0 0
        %1666 = vmatpush2.bf16.msra.mxu0 0
        %1667 = vmatprep.subr.bf16.mxu0 0
        %1668 = vmatpush2.bf16.msra.mxu0 0
        %1669 = vmatprep.subr.bf16.mxu0 0
        %1670 = vmatpush2.bf16.msra.mxu0 0
        %1671 = vmatprep.mubr.bf16.mxu0 0
        %1672 = vmatmul.mubr.bf16.gmra.mxu0 %v1634
        %v1673 = vpop.f32.mrf.mxu0
        %v1674 = vadd.f32 0.0, %v1673
        %v1675 = vpop.f32.mrf.mxu0
        %v1676 = vpop.f32.mrf.mxu0
        %v1677 = vpop.f32.mrf.mxu0
        %1678 = vdwg.mxu0
        %v1679 = vld [vmem:[%s3] sm:$0xff]
        %1681 = vset.pattern.permute.xlu0 0
        %1682 = vperm.xlu0 %1681, %v1679
        %v1683 = vpop.permute.xlu0 %1682
        %v1685 = vmul.f32 %v1539, %v1683
        %v1686 = vld [vmem:[%s4] sm:$0xff]
        %1688 = vset.pattern.permute.xlu0 0
        %1689 = vperm.xlu0 %1688, %v1686
        %v1690 = vpop.permute.xlu0 %1689
        %v1692 = vadd.f32 %v1685, %v1690
        %v1693 = vmax.f32 %v1692, 0.0
        %v1694 = vld [vmem:[%s8] sm:$0xff]
        %v1695 = vld [vmem:[%s8 + $0x8] sm:$0x1]
        %1697 = vrot.lane.b32.xlu0 %v1693, 9
        %v1698 = vpop.permute.xlu0 %1697
        %vm1700 = vcmask 72704
        %v1701 = vsel %vm1700, 0.0, %v1698
        %v1702 = vsel %vm1700, %v1698, 0.0
        %v1703 = vlaneseq
        %v1704 = vshrl.u32 %v1703, 7
        %v1705 = vsub.s32 0, %v1704
        %v1706 = vrot.slane %v1694, %v1705
        %v1707 = vmul.f32 %v1701, %v1706
        %v1708 = vlaneseq
        %v1709 = vshrl.u32 %v1708, 7
        %v1710 = vsub.s32 1, %v1709
        %v1711 = vrot.slane %v1694, %v1710
        %1713 = vrot.lane.b32.xlu0 %v1711, 1
        %v1714 = vpop.permute.xlu0 %1713
        %v1716 = vmul.f32 %v1701, %v1714
        %v1717 = vmul.f32 %v1702, %v1714
        %v1718 = vlaneseq
        %v1719 = vshrl.u32 %v1718, 7
        %v1720 = vsub.s32 2, %v1719
        %v1721 = vrot.slane %v1694, %v1720
        %1723 = vrot.lane.b32.xlu0 %v1721, 2
        %v1724 = vpop.permute.xlu0 %1723
        %v1726 = vmul.f32 %v1701, %v1724
        %v1727 = vmul.f32 %v1702, %v1724
        %v1728 = vlaneseq
        %v1729 = vshrl.u32 %v1728, 7
        %v1730 = vsub.s32 3, %v1729
        %v1731 = vrot.slane %v1694, %v1730
        %1733 = vrot.lane.b32.xlu0 %v1731, 8
        %v1734 = vpop.permute.xlu0 %1733
        %v1736 = vmul.f32 %v1701, %v1734
        %v1737 = vmul.f32 %v1702, %v1734
        %v1738 = vlaneseq
        %v1739 = vshrl.u32 %v1738, 7
        %v1740 = vsub.s32 4, %v1739
        %v1741 = vrot.slane %v1694, %v1740
        %1743 = vrot.lane.b32.xlu0 %v1741, 9
        %v1744 = vpop.permute.xlu0 %1743
        %v1746 = vmul.f32 %v1701, %v1744
        %v1747 = vmul.f32 %v1702, %v1744
        %v1748 = vlaneseq
        %v1749 = vshrl.u32 %v1748, 7
        %v1750 = vsub.s32 5, %v1749
        %v1751 = vrot.slane %v1694, %v1750
        %1753 = vrot.lane.b32.xlu0 %v1751, 10
        %v1754 = vpop.permute.xlu0 %1753
        %v1756 = vmul.f32 %v1701, %v1754
        %v1757 = vmul.f32 %v1702, %v1754
        %v1758 = vlaneseq
        %v1759 = vshrl.u32 %v1758, 7
        %v1760 = vsub.s32 6, %v1759
        %v1761 = vrot.slane %v1694, %v1760
        %1763 = vrot.lane.b32.xlu0 %v1761, 16
        %v1764 = vpop.permute.xlu0 %1763
        %v1766 = vmul.f32 %v1701, %v1764
        %v1767 = vmul.f32 %v1702, %v1764
        %v1768 = vlaneseq
        %v1769 = vshrl.u32 %v1768, 7
        %v1770 = vsub.s32 7, %v1769
        %v1771 = vrot.slane %v1694, %v1770
        %1773 = vrot.lane.b32.xlu0 %v1771, 17
        %v1774 = vpop.permute.xlu0 %1773
        %v1776 = vmul.f32 %v1701, %v1774
        %v1777 = vmul.f32 %v1702, %v1774
        %v1778 = vlaneseq
        %v1779 = vshrl.u32 %v1778, 7
        %v1780 = vsub.s32 0, %v1779
        %v1781 = vrot.slane %v1695, %v1780
        %1783 = vrot.lane.b32.xlu0 %v1781, 18
        %v1784 = vpop.permute.xlu0 %1783
        %v1786 = vmul.f32 %v1701, %v1784
        %v1787 = vmul.f32 %v1702, %v1784
        %1790 = vrot.lane.b32.xlu0 %v1716, 127
        %v1791 = vpop.permute.xlu0 %1790
        %1792 = vrot.lane.b32.xlu0 %v1717, 127
        %v1793 = vpop.permute.xlu0 %1792
        %v1794 = vsel %vm883, %v1791, %v1793
        %1798 = vrot.lane.b32.xlu0 %v1726, 126
        %v1799 = vpop.permute.xlu0 %1798
        %1800 = vrot.lane.b32.xlu0 %v1727, 126
        %v1801 = vpop.permute.xlu0 %1800
        %v1802 = vsel %vm907, %v1799, %v1801
        %1806 = vrot.lane.b32.xlu0 %v1736, 120
        %v1807 = vpop.permute.xlu0 %1806
        %1808 = vrot.lane.b32.xlu0 %v1737, 120
        %v1809 = vpop.permute.xlu0 %1808
        %vm1810 = vcmask 982016
        %v1811 = vsel %vm1810, %v1807, %v1809
        %1815 = vrot.lane.b32.xlu0 %v1746, 119
        %v1816 = vpop.permute.xlu0 %1815
        %1817 = vrot.lane.b32.xlu0 %v1747, 119
        %v1818 = vpop.permute.xlu0 %1817
        %vm1819 = vcmask 973824
        %v1820 = vsel %vm1819, %v1816, %v1818
        %1824 = vrot.lane.b32.xlu0 %v1756, 118
        %v1825 = vpop.permute.xlu0 %1824
        %1826 = vrot.lane.b32.xlu0 %v1757, 118
        %v1827 = vpop.permute.xlu0 %1826
        %vm1828 = vcmask 965632
        %v1829 = vsel %vm1828, %v1825, %v1827
        %1833 = vrot.lane.b32.xlu0 %v1766, 112
        %v1834 = vpop.permute.xlu0 %1833
        %1835 = vrot.lane.b32.xlu0 %v1767, 112
        %v1836 = vpop.permute.xlu0 %1835
        %v1837 = vsel %vm936, %v1834, %v1836
        %1841 = vrot.lane.b32.xlu0 %v1776, 111
        %v1842 = vpop.permute.xlu0 %1841
        %1843 = vrot.lane.b32.xlu0 %v1777, 111
        %v1844 = vpop.permute.xlu0 %1843
        %v1845 = vsel %vm960, %v1842, %v1844
        %1849 = vrot.lane.b32.xlu0 %v1786, 110
        %v1850 = vpop.permute.xlu0 %1849
        %1851 = vrot.lane.b32.xlu0 %v1787, 110
        %v1852 = vpop.permute.xlu0 %1851
        %v1853 = vsel %vm989, %v1850, %v1852
        %v1855 = vpack.c.bf16 %v1794, %v1707
        %v1856 = vpack.c.bf16 %v1811, %v1802
        %v1857 = vpack.c.bf16 %v1829, %v1820
        %v1858 = vpack.c.bf16 %v1845, %v1837
        %v1859 = vpack.c.bf16 %v1853, %v1853
        %v1860 = vld [vmem:[#allocation5] sm:$0xf]
        %vm1861 = vcmask 588800
        %v1863 = vsel %vm1861, %v1860, 0
        %v1866 = vsel %vm1075, %v1859, 0
        %1868 = vmatprep.subr.bf16.mxu0 0
        %1869 = vmatpush1.bf16.msra.mxu0 0
        %1870 = vmatprep.subr.bf16.mxu0 0
        %1871 = vmatpush1.bf16.msra.mxu0 0
        %1872 = vmatprep.subr.bf16.mxu0 0
        %1873 = vmatpush1.bf16.msra.mxu0 0
        %1874 = vmatprep.subr.bf16.mxu0 0
        %1875 = vmatpush1.bf16.msra.mxu0 %v1866
        %1876 = vmatprep.subr.bf16.mxu0 0
        %1877 = vmatpush1.bf16.msra.mxu0 %v1858
        %1878 = vmatprep.subr.bf16.mxu0 0
        %1879 = vmatpush1.bf16.msra.mxu0 %v1857
        %1880 = vmatprep.subr.bf16.mxu0 0
        %1881 = vmatpush1.bf16.msra.mxu0 %v1856
        %1882 = vmatprep.subr.bf16.mxu0 0
        %1883 = vmatpush1.bf16.msra.mxu0 %v1855
        %1884 = vmatprep.subr.bf16.mxu0 0
        %1885 = vmatpush2.bf16.msra.mxu0 0
        %1886 = vmatprep.subr.bf16.mxu0 0
        %1887 = vmatpush2.bf16.msra.mxu0 0
        %1888 = vmatprep.subr.bf16.mxu0 0
        %1889 = vmatpush2.bf16.msra.mxu0 0
        %1890 = vmatprep.subr.bf16.mxu0 0
        %1891 = vmatpush2.bf16.msra.mxu0 0
        %1892 = vmatprep.subr.bf16.mxu0 0
        %1893 = vmatpush2.bf16.msra.mxu0 0
        %1894 = vmatprep.subr.bf16.mxu0 0
        %1895 = vmatpush2.bf16.msra.mxu0 0
        %1896 = vmatprep.subr.bf16.mxu0 0
        %1897 = vmatpush2.bf16.msra.mxu0 0
        %1898 = vmatprep.subr.bf16.mxu0 0
        %1899 = vmatpush2.bf16.msra.mxu0 0
        %1900 = vmatprep.mubr.bf16.mxu0 0
        %1901 = vmatmul.mubr.bf16.gmra.mxu0 %v1863
        %v1902 = vpop.f32.mrf.mxu0
        %v1903 = vadd.f32 %v1674, %v1902
        %v1904 = vpop.f32.mrf.mxu0
        %v1905 = vpop.f32.mrf.mxu0
        %v1906 = vpop.f32.mrf.mxu0
        %1907 = vdwg.mxu0
        %1908 = vst [vmem:[%s435] sm:$0xff] %v1903
        %s1909 = sand.u32 %s272, 1
        %s1910 = scalar_lea.sflag [#allocation4], %s1909
        %s1911 = sand.u32 %s272, 1
        %s1912 = smul.addr %s1911, 8
        %s1913 = scalar_lea.vmem [#allocation10], %s1912
        // Predicated region
        $region81: #{tpu_custom_call.1} parent=63 // pred_check
          %p1914 = pneg %p282
        $region82: #{tpu_custom_call.1} parent=63 // pred_check_branch
          %1916 = sbr.rel (%p1914) target = $region84
        $region83: #{tpu_custom_call.1} parent=63 // pred_region
          %s1918 = ssub.s32 128, 128
          %1919 = vsyncadd %s1910, %s1918
          %s1920 = smul.addr %s28, 128
          %s1921 = scalar_lea.hbm %s11, %s1920
          %s1923 = sshll.u32 %s1913, 4
          %s1924 = int_to_ptr.vmem [resolvable:$true] %s1923
          %1926 = dma.vmem_to_hbm [thread:$0]  %s1924, 128, %s1921, %s1910
        $region84: #{tpu_custom_call.1} parent=63 // pred_fallthru
          _
      $region64: #{tpu_custom_call.1} parent=5 // pred_fallthru
        _
      %p1927 = scmp.le.s32.totalorder 2, %s23
      // Predicated region
      $region85: #{tpu_custom_call.1} parent=5 // pred_check
        %p1928 = pneg %p1927
      $region86: #{tpu_custom_call.1} parent=5 // pred_check_branch
        %1930 = sbr.rel (%p1928) target = $region88
      $region87: #{tpu_custom_call.1} parent=5 // pred_region
        %s1931 = ssub.s32 %s23, 2
        // Predicated region
        $region89: #{tpu_custom_call.1} parent=87 // pred_check
          %p1932 = pneg %p288
        $region90: #{tpu_custom_call.1} parent=87 // pred_check_branch
          %1934 = sbr.rel (%p1932) target = $region92
        $region91: #{tpu_custom_call.1} parent=87 // pred_region
          %s1935 = sand.u32 %s273, 1
          %s1936 = scalar_lea.sflag [#allocation4], %s1935
          %s1937 = sand.u32 %s273, 1
          %s1938 = smul.addr %s1937, 8
          %s1939 = scalar_lea.vmem [#allocation10], %s1938
          %1940 = dma.done %s1936, 128
        $region92: #{tpu_custom_call.1} parent=87 // pred_fallthru
          _
      $region88: #{tpu_custom_call.1} parent=5 // pred_fallthru
        _
    $region6: #{tpu_custom_call.1} parent=1 // loop_footer
      %s27 = sadd.s32 1, %s23
    $region7: #{tpu_custom_call.1} parent=1 // loop_footer_branch
      %22 = sbr.rel target = $region3
    $region8: #{tpu_custom_call.1} parent=1 // loop_exit
      _
    %1941 = vsyncpa [#allocation3], 1
    %s1942 = scalar_lea.sflag [#allocation3], 1
    %1943 = vsyncpa %s1942, 1
    %1944 = vsyncpa [#allocation6], 1
    %1945 = vsyncpa [#allocation9], 1
    %1946 = vsyncpa [#allocation4], 1
    %s1947 = scalar_lea.sflag [#allocation4], 1
    %1948 = vsyncpa %s1947, 1

</llo_original>
